<compile_context>
chip_gen: v5e
topology: v5e:2x2
jax: 0.10.0
libtpu: 0.0.40
codegen_flags: <defaults>
</compile_context>

<pallas_src>
import numpy as np

import jax
import jax.numpy as jnp
from jax.experimental import pallas as pl
from jax.experimental.pallas import tpu as pltpu

# Network geometry (fixed by model_config above).
IN_FEAT = 4 * 16 * 16      # 1024  NCHW-flattened input features
C1_OUT = 8 * 7 * 7         # 392   conv1 output features (channel-major flatten)
C1_PAD = 512               # padded to 4 lane tiles
C2_OUT = 16 * 3 * 3        # 144   conv2 output features (channel-major flatten)
C2_PAD = 256               # padded to 2 lane tiles
HID = 32                   # linear1 width
TM = 256                   # batch tile for the batched (grid) path


# ----------------------------------------------------------------------------
# One-time parameter preprocessing: lower each conv to a dense matrix that maps
# the NCHW-flattened input to the NCHW-flattened output (folds the im2col /
# transpose / pre-linear flatten reorder into the weights).
# ----------------------------------------------------------------------------
def conv_to_dense(w_oihw, bias, in_chw, stride):
    """Returns numpy (M, b): y_flat = x_flat @ M + b  ==  conv2d(x, w) + bias.

    x_flat is the channel-major (C,H,W) flatten of the input, y_flat the
    channel-major (O,oh,ow) flatten of the output (== torch.flatten on NCHW).
    """
    w = np.asarray(jax.device_get(w_oihw), np.float32)     # (O, C, KH, KW)
    b = np.asarray(jax.device_get(bias), np.float32)       # (O,)
    O, C, KH, KW = w.shape
    Cin, H, W = in_chw
    assert Cin == C, (Cin, C)
    oh = (H - KH) // stride + 1
    ow = (W - KW) // stride + 1

    M = np.zeros((C, H, W, O, oh, ow), np.float32)
    for ki in range(KH):
        for kj in range(KW):
            for p in range(oh):
                for q in range(ow):
                    # M[c, s*p+ki, s*q+kj, o, p, q] = w[o, c, ki, kj]
                    M[:, stride * p + ki, stride * q + kj, :, p, q] = w[:, :, ki, kj].T
    M = M.reshape(C * H * W, O * oh * ow)                   # row=(c,h,w), col=(o,p,q)
    b_full = np.repeat(b, oh * ow)                           # bias[o] per (o,p,q) col
    return M, b_full


def preprocess_params(params):
    """One-time lowering of the PyTorch-style params to the fused-kernel layout."""
    def np32(a):
        return np.asarray(jax.device_get(a), np.float32)

    m1, b1 = conv_to_dense(params["conv1_w"], params["conv1_b"], (4, 16, 16), 2)  # 1024->392
    m2, b2 = conv_to_dense(params["conv2_w"], params["conv2_b"], (8, 7, 7), 2)    # 392 ->144

    # Lane-pad conv outputs to multiples of 128 (zero columns / matching zero
    # rows downstream, so results are exact).
    m1p = np.zeros((IN_FEAT, C1_PAD), np.float32); m1p[:, :C1_OUT] = m1
    m2p = np.zeros((C1_PAD, C2_PAD), np.float32);  m2p[:C1_OUT, :C2_OUT] = m2
    w3p = np.zeros((C2_PAD, HID), np.float32);     w3p[:C2_OUT, :] = np32(params["lin1_w"])

    # Pack every small parameter into one (8, 512) f32 slab (single DMA).
    slab = np.zeros((8, C1_PAD), np.float32)
    slab[0, :C1_OUT] = b1                                   # conv1 bias (pads stay 0)
    slab[1, :C2_OUT] = b2                                   # conv2 bias
    slab[2, :HID] = np32(params["lin1_b"])                  # linear1 bias
    slab[3, :HID] = np32(params["lin2_w"]).reshape(-1)      # linear2 weight (32,)
    slab[4, 0] = float(np32(params["lin2_b"]).reshape(-1)[0])  # linear2 bias

    return {
        "m1": jnp.asarray(m1p, jnp.bfloat16),   # (1024, 512) bf16 ~ 1 MB
        "m2": jnp.asarray(m2p, jnp.bfloat16),   # (512, 256)  bf16 ~ 0.25 MB
        "w3": jnp.asarray(w3p, jnp.float32),    # (256, 32)   f32  ~ 32 KB
        "slab": jnp.asarray(slab, jnp.float32),  # (8, 512)   f32  ~ 16 KB
    }


# ----------------------------------------------------------------------------
# Fused kernel: conv1 -> relu -> conv2 -> (flatten) -> relu -> lin1 -> relu
#               -> lin2 (identity output activation)
# ----------------------------------------------------------------------------
def _valuenet_kernel(x_ref, m1_ref, m2_ref, w3_ref, p_ref, o_ref):
    # Small parameters packed in one slab (static slices, no extra DMAs).
    b1 = p_ref[0:1, :]              # (1, 512) conv1 bias (padded cols are 0)
    b2 = p_ref[1:2, 0:C2_PAD]       # (1, 256) conv2 bias
    b3 = p_ref[2:3, 0:HID]          # (1, 32)  linear1 bias
    w4 = p_ref[3:4, 0:HID]          # (1, 32)  linear2 weight
    b4 = p_ref[4:5, 0:1]            # (1, 1)   linear2 bias

    x = x_ref[...].astype(jnp.bfloat16)                                    # (TB, 1024)

    # conv1 (lowered to dense NCHW-flatten -> NCHW-flatten matmul) + bias + relu
    h1 = jnp.dot(x, m1_ref[...], preferred_element_type=jnp.float32) + b1
    h1 = jnp.maximum(h1, 0.0)                                              # (TB, 512)

    # conv2 (dense, output already NCHW-flatten order) + bias, then the
    # post-flatten hidden ReLU
    h2 = jnp.dot(h1.astype(jnp.bfloat16), m2_ref[...],
                 preferred_element_type=jnp.float32) + b2
    h2 = jnp.maximum(h2, 0.0)                                              # (TB, 256)

    # linear1 + relu (tiny f32 matmul)
    h3 = jnp.dot(h2, w3_ref[...], preferred_element_type=jnp.float32) + b3
    h3 = jnp.maximum(h3, 0.0)                                              # (TB, 32)

    # linear2 (32 -> 1): multiply + lane reduction on the VPU/XLU, skip the MXU
    h4 = jnp.sum(h3 * w4, axis=-1, keepdims=True) + b4                     # (TB, 1)
    o_ref[...] = h4.astype(o_ref.dtype)


# ----------------------------------------------------------------------------
# Wrapper
# ----------------------------------------------------------------------------
def _forward_impl(prep, x):
    """x: (B, 1024) f32 (NCHW flatten). Returns (B, 1) f32."""
    B = x.shape[0]
    args = (x, prep["m1"], prep["m2"], prep["w3"], prep["slab"])

    flops = 2 * B * (IN_FEAT * C1_PAD + C1_PAD * C2_PAD + C2_PAD * HID + HID)
    bytes_accessed = int(sum(int(np.prod(a.shape)) * a.dtype.itemsize for a in args)
                         + B * 4)
    cost = pl.CostEstimate(flops=flops, transcendentals=0,
                           bytes_accessed=bytes_accessed)
    out_shape = jax.ShapeDtypeStruct((B, 1), jnp.float32)

    if B <= TM:
        # Single-step path: no grid -> whole arrays resident in VMEM, no
        # double-buffering of the 1.25 MB of weights, no per-step bookkeeping.
        return pl.pallas_call(
            _valuenet_kernel,
            out_shape=out_shape,
            cost_estimate=cost,
            compiler_params=pltpu.CompilerParams(
                vmem_limit_bytes=16 * 1024 * 1024),
        )(*args)

    # Batched path: tile the batch; weights have constant index_maps so they
    # are DMA'd once and stay VMEM-resident across grid steps; the batch axis
    # is "parallel" so v7x megacore uses both TensorCores.
    grid = (pl.cdiv(B, TM),)
    in_specs = [
        pl.BlockSpec((TM, IN_FEAT), lambda i: (i, 0)),
        pl.BlockSpec(prep["m1"].shape, lambda i: (0, 0)),
        pl.BlockSpec(prep["m2"].shape, lambda i: (0, 0)),
        pl.BlockSpec(prep["w3"].shape, lambda i: (0, 0)),
        pl.BlockSpec(prep["slab"].shape, lambda i: (0, 0)),
    ]
    out_specs = pl.BlockSpec((TM, 1), lambda i: (i, 0))
    return pl.pallas_call(
        _valuenet_kernel,
        out_shape=out_shape,
        grid=grid,
        in_specs=in_specs,
        out_specs=out_specs,
        cost_estimate=cost,
        compiler_params=pltpu.CompilerParams(
            dimension_semantics=("parallel",),
            vmem_limit_bytes=32 * 1024 * 1024),
    )(*args)


@jax.jit
def value_net_forward(prep, states_nchw):
    B = states_nchw.shape[0]
    # NCHW flatten: pure reshape, matches the dense-conv input layout.
    x = states_nchw.reshape(B, -1).astype(jnp.float32)
    out = _forward_impl(prep, x)
    # Reproduce the PyTorch forward's `len(x) == 2` branch: a batch of exactly
    # two samples is returned as a tuple of the two output rows.
    if B == 2:
        return (out[0], out[1])
    return out


# ----------------------------------------------------------------------------
# Pure-JAX reference (original PyTorch-style params) for the self-check
# ----------------------------------------------------------------------------
def reference_forward(params, x):
    y = jax.lax.conv_general_dilated(
        x, params["conv1_w"], (2, 2), "VALID",
        dimension_numbers=("NCHW", "OIHW", "NCHW"))
    y = jnp.maximum(y + params["conv1_b"][None, :, None, None], 0.0)
    y = jax.lax.conv_general_dilated(
        y, params["conv2_w"], (2, 2), "VALID",
        dimension_numbers=("NCHW", "OIHW", "NCHW"))
    y = y + params["conv2_b"][None, :, None, None]
    y = jnp.maximum(y.reshape(y.shape[0], -1), 0.0)
    y = jnp.maximum(y @ params["lin1_w"] + params["lin1_b"], 0.0)
    y = y @ params["lin2_w"] + params["lin2_b"]
    return y


def init_params(key):
    ks = jax.random.split(key, 8)
    return {
        # conv weights stored PyTorch-style (O, I, KH, KW)
        "conv1_w": 0.1 * jax.random.normal(ks[0], (8, 4, 4, 4), jnp.float32),
        "conv1_b": 0.1 * jax.random.normal(ks[1], (8,), jnp.float32),
        "conv2_w": 0.1 * jax.random.normal(ks[2], (16, 8, 3, 3), jnp.float32),
        "conv2_b": 0.1 * jax.random.normal(ks[3], (16,), jnp.float32),
        # linear weights stored as (in, out) == W.T of PyTorch Linear
        "lin1_w": 0.1 * jax.random.normal(ks[4], (16 * 3 * 3, 32), jnp.float32),
        "lin1_b": 0.1 * jax.random.normal(ks[5], (32,), jnp.float32),
        "lin2_w": 0.1 * jax.random.normal(ks[6], (32, 1), jnp.float32),
        "lin2_b": 0.1 * jax.random.normal(ks[7], (1,), jnp.float32),
    }


if __name__ == "__main__":
    key = jax.random.PRNGKey(0)
    k_param, k_x = jax.random.split(key)
    params = init_params(k_param)
    prep = preprocess_params(params)   # one-time conv->dense lowering (off the hot path)

    TOL = dict(atol=3e-2, rtol=3e-2)   # bf16 conv weights => relaxed tolerance

    # --- small batch (single-step, ungridded path) -------------------------
    states4 = jax.random.normal(k_x, (4, 4, 16, 16), jnp.float32)
    out4 = jax.block_until_ready(value_net_forward(prep, states4))
    ref4 = jax.block_until_ready(reference_forward(params, states4))
    assert out4.shape == (4, 1), out4.shape
    assert jnp.allclose(out4, ref4, **TOL), (out4, ref4)

    # --- large batch (batch-tiled grid path, VMEM-resident weights) --------
    states_big = jax.random.normal(jax.random.PRNGKey(1), (512, 4, 16, 16), jnp.float32)
    out_big = jax.block_until_ready(value_net_forward(prep, states_big))
    ref_big = jax.block_until_ready(reference_forward(params, states_big))
    assert out_big.shape == (512, 1), out_big.shape
    assert jnp.allclose(out_big, ref_big, **TOL)

    # --- PyTorch `len(x) == 2` quirk: batch of 2 returns a tuple of rows ---
    out2 = value_net_forward(prep, states4[:2])
    assert isinstance(out2, tuple) and out2[0].shape == (1,), out2
    assert jnp.allclose(jnp.stack(out2), ref4[:2], **TOL)

    print("KERNEL_OK")
</pallas_src>

<mosaic_0001>
module attributes {stable_mosaic.version = 11 : i64} {
  func.func @_valuenet_kernel(%arg0: memref<4x1024xf32, #tpu.memory_space<vmem>>, %arg1: memref<1024x512xbf16, #tpu.memory_space<vmem>>, %arg2: memref<512x256xbf16, #tpu.memory_space<vmem>>, %arg3: memref<256x32xf32, #tpu.memory_space<vmem>>, %arg4: memref<8x512xf32, #tpu.memory_space<vmem>>, %arg5: memref<4x1xf32, #tpu.memory_space<vmem>>) attributes {dimension_semantics = [], scalar_prefetch = 0 : i64, scratch_operands = 0 : i64, tpu.core_type = #tpu.core_type<tc>} {
    %c0 = arith.constant 0 : index
    %c0_0 = arith.constant 0 : index
    %0 = vector.load %arg4[%c0, %c0_0] : memref<8x512xf32, #tpu.memory_space<vmem>>, vector<1x512xf32>
    %c1 = arith.constant 1 : index
    %c0_1 = arith.constant 0 : index
    %1 = vector.load %arg4[%c1, %c0_1] : memref<8x512xf32, #tpu.memory_space<vmem>>, vector<1x256xf32>
    %c2 = arith.constant 2 : index
    %c0_2 = arith.constant 0 : index
    %2 = vector.load %arg4[%c2, %c0_2] : memref<8x512xf32, #tpu.memory_space<vmem>>, vector<1x32xf32>
    %c3 = arith.constant 3 : index
    %c0_3 = arith.constant 0 : index
    %3 = vector.load %arg4[%c3, %c0_3] : memref<8x512xf32, #tpu.memory_space<vmem>>, vector<1x32xf32>
    %c4 = arith.constant 4 : index
    %c0_4 = arith.constant 0 : index
    %4 = vector.load %arg4[%c4, %c0_4] : memref<8x512xf32, #tpu.memory_space<vmem>>, vector<1x1xf32>
    %c0_5 = arith.constant 0 : index
    %c0_6 = arith.constant 0 : index
    %5 = vector.load %arg0[%c0_5, %c0_6] : memref<4x1024xf32, #tpu.memory_space<vmem>>, vector<4x1024xf32>
    %6 = arith.truncf %5 : vector<4x1024xf32> to vector<4x1024xbf16>
    %c0_7 = arith.constant 0 : index
    %c0_8 = arith.constant 0 : index
    %7 = vector.load %arg1[%c0_7, %c0_8] : memref<1024x512xbf16, #tpu.memory_space<vmem>>, vector<1024x512xbf16>
    %cst = arith.constant dense<0.000000e+00> : vector<4x512xf32>
    %8 = tpu.matmul %6, %7, %cst {dimension_numbers = #tpu.dot_dimension_numbers<[1], [0], [0], [1], [0, 0, 1, 1], [], []>} : vector<4x1024xbf16>, vector<1024x512xbf16>, vector<4x512xf32> -> vector<4x512xf32>
    %9 = vector.broadcast %0 : vector<1x512xf32> to vector<4x512xf32>
    %10 = arith.addf %8, %9 : vector<4x512xf32>
    %cst_9 = arith.constant 0.000000e+00 : f32
    %11 = vector.broadcast %cst_9 : f32 to vector<4x512xf32>
    %12 = arith.maximumf %10, %11 : vector<4x512xf32>
    %13 = arith.truncf %12 : vector<4x512xf32> to vector<4x512xbf16>
    %c0_10 = arith.constant 0 : index
    %c0_11 = arith.constant 0 : index
    %14 = vector.load %arg2[%c0_10, %c0_11] : memref<512x256xbf16, #tpu.memory_space<vmem>>, vector<512x256xbf16>
    %cst_12 = arith.constant dense<0.000000e+00> : vector<4x256xf32>
    %15 = tpu.matmul %13, %14, %cst_12 {dimension_numbers = #tpu.dot_dimension_numbers<[1], [0], [0], [1], [0, 0, 1, 1], [], []>} : vector<4x512xbf16>, vector<512x256xbf16>, vector<4x256xf32> -> vector<4x256xf32>
    %16 = vector.broadcast %1 : vector<1x256xf32> to vector<4x256xf32>
    %17 = arith.addf %15, %16 : vector<4x256xf32>
    %cst_13 = arith.constant 0.000000e+00 : f32
    %18 = vector.broadcast %cst_13 : f32 to vector<4x256xf32>
    %19 = arith.maximumf %17, %18 : vector<4x256xf32>
    %c0_14 = arith.constant 0 : index
    %c0_15 = arith.constant 0 : index
    %20 = vector.load %arg3[%c0_14, %c0_15] : memref<256x32xf32, #tpu.memory_space<vmem>>, vector<256x32xf32>
    %cst_16 = arith.constant dense<0.000000e+00> : vector<4x32xf32>
    %21 = tpu.matmul %19, %20, %cst_16 {dimension_numbers = #tpu.dot_dimension_numbers<[1], [0], [0], [1], [0, 0, 1, 1], [], []>} : vector<4x256xf32>, vector<256x32xf32>, vector<4x32xf32> -> vector<4x32xf32>
    %22 = vector.broadcast %2 : vector<1x32xf32> to vector<4x32xf32>
    %23 = arith.addf %21, %22 : vector<4x32xf32>
    %cst_17 = arith.constant 0.000000e+00 : f32
    %24 = vector.broadcast %cst_17 : f32 to vector<4x32xf32>
    %25 = arith.maximumf %23, %24 : vector<4x32xf32>
    %26 = vector.broadcast %3 : vector<1x32xf32> to vector<4x32xf32>
    %27 = arith.mulf %25, %26 : vector<4x32xf32>
    %cst_18 = arith.constant dense<0.000000e+00> : vector<4xf32>
    %28 = vector.multi_reduction <add>, %27, %cst_18 [1] : vector<4x32xf32> to vector<4xf32>
    %29 = vector.shape_cast %28 : vector<4xf32> to vector<4x1xf32>
    %30 = vector.broadcast %4 : vector<1x1xf32> to vector<4x1xf32>
    %31 = arith.addf %29, %30 : vector<4x1xf32>
    %c0_19 = arith.constant 0 : index
    %c0_20 = arith.constant 0 : index
    %32 = vector.load %arg5[%c0_19, %c0_20] : memref<4x1xf32, #tpu.memory_space<vmem>>, vector<4x1xf32>
    tpu.vector_store %arg5[%c0_19, %c0_20], %31 {strides = array<i32>} : memref<4x1xf32, #tpu.memory_space<vmem>>, vector<4x1xf32>,
    return
  }
}

</mosaic_0001>

<llo_original>
// kernel: value_net_forward.1
$region0: #{value_net_forward.1}
  #allocation0 [shape = 'u32[]', space=smem, size = 0x4, offset = 0x4, fixed_abs, tag = 'smem constant byte address 0x4 - core index']
  #allocation1 [shape = 'u32[72,128]{1,0:T(1,128)}', space=vmem, size = 0x9000, scoped, tag = 'internal scratch']
  %s0 = inlined_call_operand.vmem [shape: f32[4,1024], index: 0, kind: input, shape index: {}]
  %s1 = inlined_call_operand.hbm [shape: bf16[1024,512], index: 1, kind: input, shape index: {}]
  %s2 = inlined_call_operand.vmem [shape: bf16[512,256], index: 2, kind: input, shape index: {}]
  %s3 = inlined_call_operand.vmem [shape: f32[256,32], index: 3, kind: input, shape index: {}]
  %s4 = inlined_call_operand.vmem [shape: f32[8,512], index: 4, kind: input, shape index: {}]
  %s5 = inlined_call_operand.vmem [shape: f32[4,1], index: 5, kind: output, shape index: {}]
  %s6 = sld [smem:[#allocation0]]
  $region34: #{value_net_forward.1} parent=0
    _
  %s8 = ssub.s32 1, %s6
  %s9 = scalar_select 0, %s8, %s6
  $region1: #{value_net_forward.1} parent=0
    #allocation2 [shape = 'u8[1048576]{0}', space=vmem, size = 0x100000, scoped, tag = 'input window, operand 1, single buffered']
    #allocation3 [shape = 's32[1]{0}', space=sflag, size = 0x4, scoped, tag = 'scoped memory for value_net_forward.1']
    %10 = vsyncpa [#allocation3], 0
    // Predicated region
    $region2: #{value_net_forward.1} parent=1 // pred_check
      _
    $region3: #{value_net_forward.1} parent=1 // pred_check_branch
      %12 = sbr.rel (0) target = $region5
    $region4: #{value_net_forward.1} parent=1 // pred_region
      _
    $region5: #{value_net_forward.1} parent=1 // pred_fallthru
      _
    // Predicated region
    $region6: #{value_net_forward.1} parent=1 // pred_check
      _
    $region7: #{value_net_forward.1} parent=1 // pred_check_branch
      %14 = sbr.rel (0) target = $region9
    $region8: #{value_net_forward.1} parent=1 // pred_region
      %16 = vsyncadd [#allocation3], 0
      %s17 = sshll.u32 %s1, 4
      %s18 = int_to_ptr.hbm [resolvable:$true] %s17
      %s19 = sshll.u32 [#allocation2], 4
      %s20 = int_to_ptr.vmem [resolvable:$true] %s19
      %25 = dma.hbm_to_vmem [thread:$0]  %s18, 32768, %s20, [#allocation3], 256, 256, 16
    $region9: #{value_net_forward.1} parent=1 // pred_fallthru
      _
    // Predicated region
    $region10: #{value_net_forward.1} parent=1 // pred_check
      _
    $region11: #{value_net_forward.1} parent=1 // pred_check_branch
      %27 = sbr.rel (0) target = $region13
    $region12: #{value_net_forward.1} parent=1 // pred_region
      _
    $region13: #{value_net_forward.1} parent=1 // pred_fallthru
      _
    // Predicated region
    $region14: #{value_net_forward.1} parent=1 // pred_check
      _
    $region15: #{value_net_forward.1} parent=1 // pred_check_branch
      %29 = sbr.rel (0) target = $region17
    $region16: #{value_net_forward.1} parent=1 // pred_region
      _
    $region17: #{value_net_forward.1} parent=1 // pred_fallthru
      _
    // Predicated region
    $region18: #{value_net_forward.1} parent=1 // pred_check
      _
    $region19: #{value_net_forward.1} parent=1 // pred_check_branch
      %31 = sbr.rel (0) target = $region21
    $region20: #{value_net_forward.1} parent=1 // pred_region
      _
    $region21: #{value_net_forward.1} parent=1 // pred_fallthru
      _
    // Predicated region
    $region22: #{value_net_forward.1} parent=1 // pred_check
      _
    $region23: #{value_net_forward.1} parent=1 // pred_check_branch
      %33 = sbr.rel (0) target = $region25
    $region24: #{value_net_forward.1} parent=1 // pred_region
      %35 = dma.done [#allocation3], 32768
    $region25: #{value_net_forward.1} parent=1 // pred_fallthru
      _
    %v36 = vld [vmem:[%s4] ss:$8 sm:$0xf]
    %s37 = scalar_lea.vmem %s4, 1
    %v38 = vld [vmem:[%s37] ss:$8 sm:$0x3]
    %v39 = vld [vmem:[%s4 + $0x2] ss:$0 sm:$0xff]
    %v40 = vld [vmem:[%s4 + $0x3] ss:$0 sm:$0xff]
    %v41 = vld [vmem:[%s4 + $0x4] ss:$0 sm:$0xff]
    %v42 = vld [vmem:[%s0] sm:$0xff]
    %v43 = vld [vmem:[%s0 + $0x8] sm:$0xff]
    %v44 = vld [vmem:[%s0 + $0x10] sm:$0xff]
    %v45 = vld [vmem:[%s0 + $0x18] sm:$0xff]
    %50 = vst [vmem:[#allocation1] ss:$2 sm:$0xff] %v42
    %s51 = scalar_lea.vmem [#allocation1], 16
    %52 = vst [vmem:[%s51] ss:$2 sm:$0xff] %v43
    %s53 = scalar_lea.vmem [#allocation1], 32
    %54 = vst [vmem:[%s53] ss:$2 sm:$0xff] %v44
    %s55 = scalar_lea.vmem [#allocation1], 48
    %56 = vst [vmem:[%s55] ss:$2 sm:$0xff] %v45
    %v57 = vld.sshfl [vmem:[#allocation1] sm:$0xff pattern:$0x75316420]
    %v58 = vld.sshfl [vmem:[#allocation1 + $0x8] sm:$0xff pattern:$0x75316420]
    %v59 = vld.sshfl [vmem:[#allocation1 + $0x10] sm:$0xff pattern:$0x75316420]
    %v60 = vld.sshfl [vmem:[#allocation1 + $0x18] sm:$0xff pattern:$0x75316420]
    %v61 = vld.sshfl [vmem:[#allocation1 + $0x20] sm:$0xff pattern:$0x75316420]
    %v62 = vld.sshfl [vmem:[#allocation1 + $0x28] sm:$0xff pattern:$0x75316420]
    %v63 = vld.sshfl [vmem:[#allocation1 + $0x30] sm:$0xff pattern:$0x75316420]
    %v64 = vld.sshfl [vmem:[#allocation1 + $0x38] sm:$0xff pattern:$0x75316420]
    %v73 = vpack.c.bf16 %v57, %v57
    %v74 = vpack.c.bf16 %v58, %v58
    %v75 = vpack.c.bf16 %v59, %v59
    %v76 = vpack.c.bf16 %v60, %v60
    %v77 = vpack.c.bf16 %v61, %v61
    %v78 = vpack.c.bf16 %v62, %v62
    %v79 = vpack.c.bf16 %v63, %v63
    %v80 = vpack.c.bf16 %v64, %v64
    %v81 = vld [vmem:[#allocation2] sm:$0xff]
    %v82 = vld [vmem:[#allocation2 + $0x8] sm:$0xff]
    %v83 = vld [vmem:[#allocation2 + $0x10] sm:$0xff]
    %v84 = vld [vmem:[#allocation2 + $0x18] sm:$0xff]
    %v85 = vld [vmem:[#allocation2 + $0x20] sm:$0xff]
    %v86 = vld [vmem:[#allocation2 + $0x28] sm:$0xff]
    %v87 = vld [vmem:[#allocation2 + $0x30] sm:$0xff]
    %v88 = vld [vmem:[#allocation2 + $0x38] sm:$0xff]
    %v89 = vld [vmem:[#allocation2 + $0x40] sm:$0xff]
    %v90 = vld [vmem:[#allocation2 + $0x48] sm:$0xff]
    %v91 = vld [vmem:[#allocation2 + $0x50] sm:$0xff]
    %v92 = vld [vmem:[#allocation2 + $0x58] sm:$0xff]
    %v93 = vld [vmem:[#allocation2 + $0x60] sm:$0xff]
    %v94 = vld [vmem:[#allocation2 + $0x68] sm:$0xff]
    %v95 = vld [vmem:[#allocation2 + $0x70] sm:$0xff]
    %v96 = vld [vmem:[#allocation2 + $0x78] sm:$0xff]
    %v97 = vld [vmem:[#allocation2 + $0x80] sm:$0xff]
    %v98 = vld [vmem:[#allocation2 + $0x88] sm:$0xff]
    %v99 = vld [vmem:[#allocation2 + $0x90] sm:$0xff]
    %v100 = vld [vmem:[#allocation2 + $0x98] sm:$0xff]
    %v101 = vld [vmem:[#allocation2 + $0xa0] sm:$0xff]
    %v102 = vld [vmem:[#allocation2 + $0xa8] sm:$0xff]
    %v103 = vld [vmem:[#allocation2 + $0xb0] sm:$0xff]
    %v104 = vld [vmem:[#allocation2 + $0xb8] sm:$0xff]
    %v105 = vld [vmem:[#allocation2 + $0xc0] sm:$0xff]
    %v106 = vld [vmem:[#allocation2 + $0xc8] sm:$0xff]
    %v107 = vld [vmem:[#allocation2 + $0xd0] sm:$0xff]
    %v108 = vld [vmem:[#allocation2 + $0xd8] sm:$0xff]
    %v109 = vld [vmem:[#allocation2 + $0xe0] sm:$0xff]
    %v110 = vld [vmem:[#allocation2 + $0xe8] sm:$0xff]
    %v111 = vld [vmem:[#allocation2 + $0xf0] sm:$0xff]
    %v112 = vld [vmem:[#allocation2 + $0xf8] sm:$0xff]
    %v113 = vld [vmem:[#allocation2 + $0x100] sm:$0xff]
    %v114 = vld [vmem:[#allocation2 + $0x108] sm:$0xff]
    %v115 = vld [vmem:[#allocation2 + $0x110] sm:$0xff]
    %v116 = vld [vmem:[#allocation2 + $0x118] sm:$0xff]
    %v117 = vld [vmem:[#allocation2 + $0x120] sm:$0xff]
    %v118 = vld [vmem:[#allocation2 + $0x128] sm:$0xff]
    %v119 = vld [vmem:[#allocation2 + $0x130] sm:$0xff]
    %v120 = vld [vmem:[#allocation2 + $0x138] sm:$0xff]
    %v121 = vld [vmem:[#allocation2 + $0x140] sm:$0xff]
    %v122 = vld [vmem:[#allocation2 + $0x148] sm:$0xff]
    %v123 = vld [vmem:[#allocation2 + $0x150] sm:$0xff]
    %v124 = vld [vmem:[#allocation2 + $0x158] sm:$0xff]
    %v125 = vld [vmem:[#allocation2 + $0x160] sm:$0xff]
    %v126 = vld [vmem:[#allocation2 + $0x168] sm:$0xff]
    %v127 = vld [vmem:[#allocation2 + $0x170] sm:$0xff]
    %v128 = vld [vmem:[#allocation2 + $0x178] sm:$0xff]
    %v129 = vld [vmem:[#allocation2 + $0x180] sm:$0xff]
    %v130 = vld [vmem:[#allocation2 + $0x188] sm:$0xff]
    %v131 = vld [vmem:[#allocation2 + $0x190] sm:$0xff]
    %v132 = vld [vmem:[#allocation2 + $0x198] sm:$0xff]
    %v133 = vld [vmem:[#allocation2 + $0x1a0] sm:$0xff]
    %v134 = vld [vmem:[#allocation2 + $0x1a8] sm:$0xff]
    %v135 = vld [vmem:[#allocation2 + $0x1b0] sm:$0xff]
    %v136 = vld [vmem:[#allocation2 + $0x1b8] sm:$0xff]
    %v137 = vld [vmem:[#allocation2 + $0x1c0] sm:$0xff]
    %v138 = vld [vmem:[#allocation2 + $0x1c8] sm:$0xff]
    %v139 = vld [vmem:[#allocation2 + $0x1d0] sm:$0xff]
    %v140 = vld [vmem:[#allocation2 + $0x1d8] sm:$0xff]
    %v141 = vld [vmem:[#allocation2 + $0x1e0] sm:$0xff]
    %v142 = vld [vmem:[#allocation2 + $0x1e8] sm:$0xff]
    %v143 = vld [vmem:[#allocation2 + $0x1f0] sm:$0xff]
    %v144 = vld [vmem:[#allocation2 + $0x1f8] sm:$0xff]
    %v145 = vld [vmem:[#allocation2 + $0x200] sm:$0xff]
    %v146 = vld [vmem:[#allocation2 + $0x208] sm:$0xff]
    %v147 = vld [vmem:[#allocation2 + $0x210] sm:$0xff]
    %v148 = vld [vmem:[#allocation2 + $0x218] sm:$0xff]
    %v149 = vld [vmem:[#allocation2 + $0x220] sm:$0xff]
    %v150 = vld [vmem:[#allocation2 + $0x228] sm:$0xff]
    %v151 = vld [vmem:[#allocation2 + $0x230] sm:$0xff]
    %v152 = vld [vmem:[#allocation2 + $0x238] sm:$0xff]
    %v153 = vld [vmem:[#allocation2 + $0x240] sm:$0xff]
    %v154 = vld [vmem:[#allocation2 + $0x248] sm:$0xff]
    %v155 = vld [vmem:[#allocation2 + $0x250] sm:$0xff]
    %v156 = vld [vmem:[#allocation2 + $0x258] sm:$0xff]
    %v157 = vld [vmem:[#allocation2 + $0x260] sm:$0xff]
    %v158 = vld [vmem:[#allocation2 + $0x268] sm:$0xff]
    %v159 = vld [vmem:[#allocation2 + $0x270] sm:$0xff]
    %v160 = vld [vmem:[#allocation2 + $0x278] sm:$0xff]
    %v161 = vld [vmem:[#allocation2 + $0x280] sm:$0xff]
    %v162 = vld [vmem:[#allocation2 + $0x288] sm:$0xff]
    %v163 = vld [vmem:[#allocation2 + $0x290] sm:$0xff]
    %v164 = vld [vmem:[#allocation2 + $0x298] sm:$0xff]
    %v165 = vld [vmem:[#allocation2 + $0x2a0] sm:$0xff]
    %v166 = vld [vmem:[#allocation2 + $0x2a8] sm:$0xff]
    %v167 = vld [vmem:[#allocation2 + $0x2b0] sm:$0xff]
    %v168 = vld [vmem:[#allocation2 + $0x2b8] sm:$0xff]
    %v169 = vld [vmem:[#allocation2 + $0x2c0] sm:$0xff]
    %v170 = vld [vmem:[#allocation2 + $0x2c8] sm:$0xff]
    %v171 = vld [vmem:[#allocation2 + $0x2d0] sm:$0xff]
    %v172 = vld [vmem:[#allocation2 + $0x2d8] sm:$0xff]
    %v173 = vld [vmem:[#allocation2 + $0x2e0] sm:$0xff]
    %v174 = vld [vmem:[#allocation2 + $0x2e8] sm:$0xff]
    %v175 = vld [vmem:[#allocation2 + $0x2f0] sm:$0xff]
    %v176 = vld [vmem:[#allocation2 + $0x2f8] sm:$0xff]
    %v177 = vld [vmem:[#allocation2 + $0x300] sm:$0xff]
    %v178 = vld [vmem:[#allocation2 + $0x308] sm:$0xff]
    %v179 = vld [vmem:[#allocation2 + $0x310] sm:$0xff]
    %v180 = vld [vmem:[#allocation2 + $0x318] sm:$0xff]
    %v181 = vld [vmem:[#allocation2 + $0x320] sm:$0xff]
    %v182 = vld [vmem:[#allocation2 + $0x328] sm:$0xff]
    %v183 = vld [vmem:[#allocation2 + $0x330] sm:$0xff]
    %v184 = vld [vmem:[#allocation2 + $0x338] sm:$0xff]
    %v185 = vld [vmem:[#allocation2 + $0x340] sm:$0xff]
    %v186 = vld [vmem:[#allocation2 + $0x348] sm:$0xff]
    %v187 = vld [vmem:[#allocation2 + $0x350] sm:$0xff]
    %v188 = vld [vmem:[#allocation2 + $0x358] sm:$0xff]
    %v189 = vld [vmem:[#allocation2 + $0x360] sm:$0xff]
    %v190 = vld [vmem:[#allocation2 + $0x368] sm:$0xff]
    %v191 = vld [vmem:[#allocation2 + $0x370] sm:$0xff]
    %v192 = vld [vmem:[#allocation2 + $0x378] sm:$0xff]
    %v193 = vld [vmem:[#allocation2 + $0x380] sm:$0xff]
    %v194 = vld [vmem:[#allocation2 + $0x388] sm:$0xff]
    %v195 = vld [vmem:[#allocation2 + $0x390] sm:$0xff]
    %v196 = vld [vmem:[#allocation2 + $0x398] sm:$0xff]
    %v197 = vld [vmem:[#allocation2 + $0x3a0] sm:$0xff]
    %v198 = vld [vmem:[#allocation2 + $0x3a8] sm:$0xff]
    %v199 = vld [vmem:[#allocation2 + $0x3b0] sm:$0xff]
    %v200 = vld [vmem:[#allocation2 + $0x3b8] sm:$0xff]
    %v201 = vld [vmem:[#allocation2 + $0x3c0] sm:$0xff]
    %v202 = vld [vmem:[#allocation2 + $0x3c8] sm:$0xff]
    %v203 = vld [vmem:[#allocation2 + $0x3d0] sm:$0xff]
    %v204 = vld [vmem:[#allocation2 + $0x3d8] sm:$0xff]
    %v205 = vld [vmem:[#allocation2 + $0x3e0] sm:$0xff]
    %v206 = vld [vmem:[#allocation2 + $0x3e8] sm:$0xff]
    %v207 = vld [vmem:[#allocation2 + $0x3f0] sm:$0xff]
    %v208 = vld [vmem:[#allocation2 + $0x3f8] sm:$0xff]
    %v209 = vld [vmem:[#allocation2 + $0x400] sm:$0xff]
    %v210 = vld [vmem:[#allocation2 + $0x408] sm:$0xff]
    %v211 = vld [vmem:[#allocation2 + $0x410] sm:$0xff]
    %v212 = vld [vmem:[#allocation2 + $0x418] sm:$0xff]
    %v213 = vld [vmem:[#allocation2 + $0x420] sm:$0xff]
    %v214 = vld [vmem:[#allocation2 + $0x428] sm:$0xff]
    %v215 = vld [vmem:[#allocation2 + $0x430] sm:$0xff]
    %v216 = vld [vmem:[#allocation2 + $0x438] sm:$0xff]
    %v217 = vld [vmem:[#allocation2 + $0x440] sm:$0xff]
    %v218 = vld [vmem:[#allocation2 + $0x448] sm:$0xff]
    %v219 = vld [vmem:[#allocation2 + $0x450] sm:$0xff]
    %v220 = vld [vmem:[#allocation2 + $0x458] sm:$0xff]
    %v221 = vld [vmem:[#allocation2 + $0x460] sm:$0xff]
    %v222 = vld [vmem:[#allocation2 + $0x468] sm:$0xff]
    %v223 = vld [vmem:[#allocation2 + $0x470] sm:$0xff]
    %v224 = vld [vmem:[#allocation2 + $0x478] sm:$0xff]
    %v225 = vld [vmem:[#allocation2 + $0x480] sm:$0xff]
    %v226 = vld [vmem:[#allocation2 + $0x488] sm:$0xff]
    %v227 = vld [vmem:[#allocation2 + $0x490] sm:$0xff]
    %v228 = vld [vmem:[#allocation2 + $0x498] sm:$0xff]
    %v229 = vld [vmem:[#allocation2 + $0x4a0] sm:$0xff]
    %v230 = vld [vmem:[#allocation2 + $0x4a8] sm:$0xff]
    %v231 = vld [vmem:[#allocation2 + $0x4b0] sm:$0xff]
    %v232 = vld [vmem:[#allocation2 + $0x4b8] sm:$0xff]
    %v233 = vld [vmem:[#allocation2 + $0x4c0] sm:$0xff]
    %v234 = vld [vmem:[#allocation2 + $0x4c8] sm:$0xff]
    %v235 = vld [vmem:[#allocation2 + $0x4d0] sm:$0xff]
    %v236 = vld [vmem:[#allocation2 + $0x4d8] sm:$0xff]
    %v237 = vld [vmem:[#allocation2 + $0x4e0] sm:$0xff]
    %v238 = vld [vmem:[#allocation2 + $0x4e8] sm:$0xff]
    %v239 = vld [vmem:[#allocation2 + $0x4f0] sm:$0xff]
    %v240 = vld [vmem:[#allocation2 + $0x4f8] sm:$0xff]
    %v241 = vld [vmem:[#allocation2 + $0x500] sm:$0xff]
    %v242 = vld [vmem:[#allocation2 + $0x508] sm:$0xff]
    %v243 = vld [vmem:[#allocation2 + $0x510] sm:$0xff]
    %v244 = vld [vmem:[#allocation2 + $0x518] sm:$0xff]
    %v245 = vld [vmem:[#allocation2 + $0x520] sm:$0xff]
    %v246 = vld [vmem:[#allocation2 + $0x528] sm:$0xff]
    %v247 = vld [vmem:[#allocation2 + $0x530] sm:$0xff]
    %v248 = vld [vmem:[#allocation2 + $0x538] sm:$0xff]
    %v249 = vld [vmem:[#allocation2 + $0x540] sm:$0xff]
    %v250 = vld [vmem:[#allocation2 + $0x548] sm:$0xff]
    %v251 = vld [vmem:[#allocation2 + $0x550] sm:$0xff]
    %v252 = vld [vmem:[#allocation2 + $0x558] sm:$0xff]
    %v253 = vld [vmem:[#allocation2 + $0x560] sm:$0xff]
    %v254 = vld [vmem:[#allocation2 + $0x568] sm:$0xff]
    %v255 = vld [vmem:[#allocation2 + $0x570] sm:$0xff]
    %v256 = vld [vmem:[#allocation2 + $0x578] sm:$0xff]
    %v257 = vld [vmem:[#allocation2 + $0x580] sm:$0xff]
    %v258 = vld [vmem:[#allocation2 + $0x588] sm:$0xff]
    %v259 = vld [vmem:[#allocation2 + $0x590] sm:$0xff]
    %v260 = vld [vmem:[#allocation2 + $0x598] sm:$0xff]
    %v261 = vld [vmem:[#allocation2 + $0x5a0] sm:$0xff]
    %v262 = vld [vmem:[#allocation2 + $0x5a8] sm:$0xff]
    %v263 = vld [vmem:[#allocation2 + $0x5b0] sm:$0xff]
    %v264 = vld [vmem:[#allocation2 + $0x5b8] sm:$0xff]
    %v265 = vld [vmem:[#allocation2 + $0x5c0] sm:$0xff]
    %v266 = vld [vmem:[#allocation2 + $0x5c8] sm:$0xff]
    %v267 = vld [vmem:[#allocation2 + $0x5d0] sm:$0xff]
    %v268 = vld [vmem:[#allocation2 + $0x5d8] sm:$0xff]
    %v269 = vld [vmem:[#allocation2 + $0x5e0] sm:$0xff]
    %v270 = vld [vmem:[#allocation2 + $0x5e8] sm:$0xff]
    %v271 = vld [vmem:[#allocation2 + $0x5f0] sm:$0xff]
    %v272 = vld [vmem:[#allocation2 + $0x5f8] sm:$0xff]
    %v273 = vld [vmem:[#allocation2 + $0x600] sm:$0xff]
    %v274 = vld [vmem:[#allocation2 + $0x608] sm:$0xff]
    %v275 = vld [vmem:[#allocation2 + $0x610] sm:$0xff]
    %v276 = vld [vmem:[#allocation2 + $0x618] sm:$0xff]
    %v277 = vld [vmem:[#allocation2 + $0x620] sm:$0xff]
    %v278 = vld [vmem:[#allocation2 + $0x628] sm:$0xff]
    %v279 = vld [vmem:[#allocation2 + $0x630] sm:$0xff]
    %v280 = vld [vmem:[#allocation2 + $0x638] sm:$0xff]
    %v281 = vld [vmem:[#allocation2 + $0x640] sm:$0xff]
    %v282 = vld [vmem:[#allocation2 + $0x648] sm:$0xff]
    %v283 = vld [vmem:[#allocation2 + $0x650] sm:$0xff]
    %v284 = vld [vmem:[#allocation2 + $0x658] sm:$0xff]
    %v285 = vld [vmem:[#allocation2 + $0x660] sm:$0xff]
    %v286 = vld [vmem:[#allocation2 + $0x668] sm:$0xff]
    %v287 = vld [vmem:[#allocation2 + $0x670] sm:$0xff]
    %v288 = vld [vmem:[#allocation2 + $0x678] sm:$0xff]
    %v289 = vld [vmem:[#allocation2 + $0x680] sm:$0xff]
    %v290 = vld [vmem:[#allocation2 + $0x688] sm:$0xff]
    %v291 = vld [vmem:[#allocation2 + $0x690] sm:$0xff]
    %v292 = vld [vmem:[#allocation2 + $0x698] sm:$0xff]
    %v293 = vld [vmem:[#allocation2 + $0x6a0] sm:$0xff]
    %v294 = vld [vmem:[#allocation2 + $0x6a8] sm:$0xff]
    %v295 = vld [vmem:[#allocation2 + $0x6b0] sm:$0xff]
    %v296 = vld [vmem:[#allocation2 + $0x6b8] sm:$0xff]
    %v297 = vld [vmem:[#allocation2 + $0x6c0] sm:$0xff]
    %v298 = vld [vmem:[#allocation2 + $0x6c8] sm:$0xff]
    %v299 = vld [vmem:[#allocation2 + $0x6d0] sm:$0xff]
    %v300 = vld [vmem:[#allocation2 + $0x6d8] sm:$0xff]
    %v301 = vld [vmem:[#allocation2 + $0x6e0] sm:$0xff]
    %v302 = vld [vmem:[#allocation2 + $0x6e8] sm:$0xff]
    %v303 = vld [vmem:[#allocation2 + $0x6f0] sm:$0xff]
    %v304 = vld [vmem:[#allocation2 + $0x6f8] sm:$0xff]
    %v305 = vld [vmem:[#allocation2 + $0x700] sm:$0xff]
    %v306 = vld [vmem:[#allocation2 + $0x708] sm:$0xff]
    %v307 = vld [vmem:[#allocation2 + $0x710] sm:$0xff]
    %v308 = vld [vmem:[#allocation2 + $0x718] sm:$0xff]
    %v309 = vld [vmem:[#allocation2 + $0x720] sm:$0xff]
    %v310 = vld [vmem:[#allocation2 + $0x728] sm:$0xff]
    %v311 = vld [vmem:[#allocation2 + $0x730] sm:$0xff]
    %v312 = vld [vmem:[#allocation2 + $0x738] sm:$0xff]
    %v313 = vld [vmem:[#allocation2 + $0x740] sm:$0xff]
    %v314 = vld [vmem:[#allocation2 + $0x748] sm:$0xff]
    %v315 = vld [vmem:[#allocation2 + $0x750] sm:$0xff]
    %v316 = vld [vmem:[#allocation2 + $0x758] sm:$0xff]
    %v317 = vld [vmem:[#allocation2 + $0x760] sm:$0xff]
    %v318 = vld [vmem:[#allocation2 + $0x768] sm:$0xff]
    %v319 = vld [vmem:[#allocation2 + $0x770] sm:$0xff]
    %v320 = vld [vmem:[#allocation2 + $0x778] sm:$0xff]
    %v321 = vld [vmem:[#allocation2 + $0x780] sm:$0xff]
    %v322 = vld [vmem:[#allocation2 + $0x788] sm:$0xff]
    %v323 = vld [vmem:[#allocation2 + $0x790] sm:$0xff]
    %v324 = vld [vmem:[#allocation2 + $0x798] sm:$0xff]
    %v325 = vld [vmem:[#allocation2 + $0x7a0] sm:$0xff]
    %v326 = vld [vmem:[#allocation2 + $0x7a8] sm:$0xff]
    %v327 = vld [vmem:[#allocation2 + $0x7b0] sm:$0xff]
    %v328 = vld [vmem:[#allocation2 + $0x7b8] sm:$0xff]
    %v329 = vld [vmem:[#allocation2 + $0x7c0] sm:$0xff]
    %v330 = vld [vmem:[#allocation2 + $0x7c8] sm:$0xff]
    %v331 = vld [vmem:[#allocation2 + $0x7d0] sm:$0xff]
    %v332 = vld [vmem:[#allocation2 + $0x7d8] sm:$0xff]
    %v333 = vld [vmem:[#allocation2 + $0x7e0] sm:$0xff]
    %v334 = vld [vmem:[#allocation2 + $0x7e8] sm:$0xff]
    %v335 = vld [vmem:[#allocation2 + $0x7f0] sm:$0xff]
    %v336 = vld [vmem:[#allocation2 + $0x7f8] sm:$0xff]
    %v338 = vperm.slane %v36, 0
    %v339 = vperm.slane %v36, 1
    %v340 = vperm.slane %v36, 2
    %v341 = vperm.slane %v36, 3
    %v602 = vunpack.c.l.b16 %v81
    %v603 = vunpack.c.h.b16 %v81
    %v604 = vunpack.c.l.b16 %v82
    %v605 = vunpack.c.h.b16 %v82
    %v606 = vunpack.c.l.b16 %v83
    %v607 = vunpack.c.h.b16 %v83
    %v608 = vunpack.c.l.b16 %v84
    %v609 = vunpack.c.h.b16 %v84
    %v610 = vunpack.c.l.b16 %v85
    %v611 = vunpack.c.h.b16 %v85
    %v612 = vunpack.c.l.b16 %v86
    %v613 = vunpack.c.h.b16 %v86
    %v614 = vunpack.c.l.b16 %v87
    %v615 = vunpack.c.h.b16 %v87
    %v616 = vunpack.c.l.b16 %v88
    %v617 = vunpack.c.h.b16 %v88
    %v618 = vunpack.c.l.b16 %v89
    %v619 = vunpack.c.h.b16 %v89
    %v620 = vunpack.c.l.b16 %v90
    %v621 = vunpack.c.h.b16 %v90
    %v622 = vunpack.c.l.b16 %v91
    %v623 = vunpack.c.h.b16 %v91
    %v624 = vunpack.c.l.b16 %v92
    %v625 = vunpack.c.h.b16 %v92
    %v626 = vunpack.c.l.b16 %v93
    %v627 = vunpack.c.h.b16 %v93
    %v628 = vunpack.c.l.b16 %v94
    %v629 = vunpack.c.h.b16 %v94
    %v630 = vunpack.c.l.b16 %v95
    %v631 = vunpack.c.h.b16 %v95
    %v632 = vunpack.c.l.b16 %v96
    %v633 = vunpack.c.h.b16 %v96
    %v634 = vunpack.c.l.b16 %v97
    %v635 = vunpack.c.h.b16 %v97
    %v636 = vunpack.c.l.b16 %v98
    %v637 = vunpack.c.h.b16 %v98
    %v638 = vunpack.c.l.b16 %v99
    %v639 = vunpack.c.h.b16 %v99
    %v640 = vunpack.c.l.b16 %v100
    %v641 = vunpack.c.h.b16 %v100
    %v642 = vunpack.c.l.b16 %v101
    %v643 = vunpack.c.h.b16 %v101
    %v644 = vunpack.c.l.b16 %v102
    %v645 = vunpack.c.h.b16 %v102
    %v646 = vunpack.c.l.b16 %v103
    %v647 = vunpack.c.h.b16 %v103
    %v648 = vunpack.c.l.b16 %v104
    %v649 = vunpack.c.h.b16 %v104
    %v650 = vunpack.c.l.b16 %v105
    %v651 = vunpack.c.h.b16 %v105
    %v652 = vunpack.c.l.b16 %v106
    %v653 = vunpack.c.h.b16 %v106
    %v654 = vunpack.c.l.b16 %v107
    %v655 = vunpack.c.h.b16 %v107
    %v656 = vunpack.c.l.b16 %v108
    %v657 = vunpack.c.h.b16 %v108
    %v658 = vunpack.c.l.b16 %v109
    %v659 = vunpack.c.h.b16 %v109
    %v660 = vunpack.c.l.b16 %v110
    %v661 = vunpack.c.h.b16 %v110
    %v662 = vunpack.c.l.b16 %v111
    %v663 = vunpack.c.h.b16 %v111
    %v664 = vunpack.c.l.b16 %v112
    %v665 = vunpack.c.h.b16 %v112
    %v666 = vunpack.c.l.b16 %v113
    %v667 = vunpack.c.h.b16 %v113
    %v668 = vunpack.c.l.b16 %v114
    %v669 = vunpack.c.h.b16 %v114
    %v670 = vunpack.c.l.b16 %v115
    %v671 = vunpack.c.h.b16 %v115
    %v672 = vunpack.c.l.b16 %v116
    %v673 = vunpack.c.h.b16 %v116
    %v674 = vunpack.c.l.b16 %v117
    %v675 = vunpack.c.h.b16 %v117
    %v676 = vunpack.c.l.b16 %v118
    %v677 = vunpack.c.h.b16 %v118
    %v678 = vunpack.c.l.b16 %v119
    %v679 = vunpack.c.h.b16 %v119
    %v680 = vunpack.c.l.b16 %v120
    %v681 = vunpack.c.h.b16 %v120
    %v682 = vunpack.c.l.b16 %v121
    %v683 = vunpack.c.h.b16 %v121
    %v684 = vunpack.c.l.b16 %v122
    %v685 = vunpack.c.h.b16 %v122
    %v686 = vunpack.c.l.b16 %v123
    %v687 = vunpack.c.h.b16 %v123
    %v688 = vunpack.c.l.b16 %v124
    %v689 = vunpack.c.h.b16 %v124
    %v690 = vunpack.c.l.b16 %v125
    %v691 = vunpack.c.h.b16 %v125
    %v692 = vunpack.c.l.b16 %v126
    %v693 = vunpack.c.h.b16 %v126
    %v694 = vunpack.c.l.b16 %v127
    %v695 = vunpack.c.h.b16 %v127
    %v696 = vunpack.c.l.b16 %v128
    %v697 = vunpack.c.h.b16 %v128
    %v698 = vunpack.c.l.b16 %v129
    %v699 = vunpack.c.h.b16 %v129
    %v700 = vunpack.c.l.b16 %v130
    %v701 = vunpack.c.h.b16 %v130
    %v702 = vunpack.c.l.b16 %v131
    %v703 = vunpack.c.h.b16 %v131
    %v704 = vunpack.c.l.b16 %v132
    %v705 = vunpack.c.h.b16 %v132
    %v706 = vunpack.c.l.b16 %v133
    %v707 = vunpack.c.h.b16 %v133
    %v708 = vunpack.c.l.b16 %v134
    %v709 = vunpack.c.h.b16 %v134
    %v710 = vunpack.c.l.b16 %v135
    %v711 = vunpack.c.h.b16 %v135
    %v712 = vunpack.c.l.b16 %v136
    %v713 = vunpack.c.h.b16 %v136
    %v714 = vunpack.c.l.b16 %v137
    %v715 = vunpack.c.h.b16 %v137
    %v716 = vunpack.c.l.b16 %v138
    %v717 = vunpack.c.h.b16 %v138
    %v718 = vunpack.c.l.b16 %v139
    %v719 = vunpack.c.h.b16 %v139
    %v720 = vunpack.c.l.b16 %v140
    %v721 = vunpack.c.h.b16 %v140
    %v722 = vunpack.c.l.b16 %v141
    %v723 = vunpack.c.h.b16 %v141
    %v724 = vunpack.c.l.b16 %v142
    %v725 = vunpack.c.h.b16 %v142
    %v726 = vunpack.c.l.b16 %v143
    %v727 = vunpack.c.h.b16 %v143
    %v728 = vunpack.c.l.b16 %v144
    %v729 = vunpack.c.h.b16 %v144
    %v730 = vunpack.c.l.b16 %v145
    %v731 = vunpack.c.h.b16 %v145
    %v732 = vunpack.c.l.b16 %v146
    %v733 = vunpack.c.h.b16 %v146
    %v734 = vunpack.c.l.b16 %v147
    %v735 = vunpack.c.h.b16 %v147
    %v736 = vunpack.c.l.b16 %v148
    %v737 = vunpack.c.h.b16 %v148
    %v738 = vunpack.c.l.b16 %v149
    %v739 = vunpack.c.h.b16 %v149
    %v740 = vunpack.c.l.b16 %v150
    %v741 = vunpack.c.h.b16 %v150
    %v742 = vunpack.c.l.b16 %v151
    %v743 = vunpack.c.h.b16 %v151
    %v744 = vunpack.c.l.b16 %v152
    %v745 = vunpack.c.h.b16 %v152
    %v746 = vunpack.c.l.b16 %v153
    %v747 = vunpack.c.h.b16 %v153
    %v748 = vunpack.c.l.b16 %v154
    %v749 = vunpack.c.h.b16 %v154
    %v750 = vunpack.c.l.b16 %v155
    %v751 = vunpack.c.h.b16 %v155
    %v752 = vunpack.c.l.b16 %v156
    %v753 = vunpack.c.h.b16 %v156
    %v754 = vunpack.c.l.b16 %v157
    %v755 = vunpack.c.h.b16 %v157
    %v756 = vunpack.c.l.b16 %v158
    %v757 = vunpack.c.h.b16 %v158
    %v758 = vunpack.c.l.b16 %v159
    %v759 = vunpack.c.h.b16 %v159
    %v760 = vunpack.c.l.b16 %v160
    %v761 = vunpack.c.h.b16 %v160
    %v762 = vunpack.c.l.b16 %v161
    %v763 = vunpack.c.h.b16 %v161
    %v764 = vunpack.c.l.b16 %v162
    %v765 = vunpack.c.h.b16 %v162
    %v766 = vunpack.c.l.b16 %v163
    %v767 = vunpack.c.h.b16 %v163
    %v768 = vunpack.c.l.b16 %v164
    %v769 = vunpack.c.h.b16 %v164
    %v770 = vunpack.c.l.b16 %v165
    %v771 = vunpack.c.h.b16 %v165
    %v772 = vunpack.c.l.b16 %v166
    %v773 = vunpack.c.h.b16 %v166
    %v774 = vunpack.c.l.b16 %v167
    %v775 = vunpack.c.h.b16 %v167
    %v776 = vunpack.c.l.b16 %v168
    %v777 = vunpack.c.h.b16 %v168
    %v778 = vunpack.c.l.b16 %v169
    %v779 = vunpack.c.h.b16 %v169
    %v780 = vunpack.c.l.b16 %v170
    %v781 = vunpack.c.h.b16 %v170
    %v782 = vunpack.c.l.b16 %v171
    %v783 = vunpack.c.h.b16 %v171
    %v784 = vunpack.c.l.b16 %v172
    %v785 = vunpack.c.h.b16 %v172
    %v786 = vunpack.c.l.b16 %v173
    %v787 = vunpack.c.h.b16 %v173
    %v788 = vunpack.c.l.b16 %v174
    %v789 = vunpack.c.h.b16 %v174
    %v790 = vunpack.c.l.b16 %v175
    %v791 = vunpack.c.h.b16 %v175
    %v792 = vunpack.c.l.b16 %v176
    %v793 = vunpack.c.h.b16 %v176
    %v794 = vunpack.c.l.b16 %v177
    %v795 = vunpack.c.h.b16 %v177
    %v796 = vunpack.c.l.b16 %v178
    %v797 = vunpack.c.h.b16 %v178
    %v798 = vunpack.c.l.b16 %v179
    %v799 = vunpack.c.h.b16 %v179
    %v800 = vunpack.c.l.b16 %v180
    %v801 = vunpack.c.h.b16 %v180
    %v802 = vunpack.c.l.b16 %v181
    %v803 = vunpack.c.h.b16 %v181
    %v804 = vunpack.c.l.b16 %v182
    %v805 = vunpack.c.h.b16 %v182
    %v806 = vunpack.c.l.b16 %v183
    %v807 = vunpack.c.h.b16 %v183
    %v808 = vunpack.c.l.b16 %v184
    %v809 = vunpack.c.h.b16 %v184
    %v810 = vunpack.c.l.b16 %v185
    %v811 = vunpack.c.h.b16 %v185
    %v812 = vunpack.c.l.b16 %v186
    %v813 = vunpack.c.h.b16 %v186
    %v814 = vunpack.c.l.b16 %v187
    %v815 = vunpack.c.h.b16 %v187
    %v816 = vunpack.c.l.b16 %v188
    %v817 = vunpack.c.h.b16 %v188
    %v818 = vunpack.c.l.b16 %v189
    %v819 = vunpack.c.h.b16 %v189
    %v820 = vunpack.c.l.b16 %v190
    %v821 = vunpack.c.h.b16 %v190
    %v822 = vunpack.c.l.b16 %v191
    %v823 = vunpack.c.h.b16 %v191
    %v824 = vunpack.c.l.b16 %v192
    %v825 = vunpack.c.h.b16 %v192
    %v826 = vunpack.c.l.b16 %v193
    %v827 = vunpack.c.h.b16 %v193
    %v828 = vunpack.c.l.b16 %v194
    %v829 = vunpack.c.h.b16 %v194
    %v830 = vunpack.c.l.b16 %v195
    %v831 = vunpack.c.h.b16 %v195
    %v832 = vunpack.c.l.b16 %v196
    %v833 = vunpack.c.h.b16 %v196
    %v834 = vunpack.c.l.b16 %v197
    %v835 = vunpack.c.h.b16 %v197
    %v836 = vunpack.c.l.b16 %v198
    %v837 = vunpack.c.h.b16 %v198
    %v838 = vunpack.c.l.b16 %v199
    %v839 = vunpack.c.h.b16 %v199
    %v840 = vunpack.c.l.b16 %v200
    %v841 = vunpack.c.h.b16 %v200
    %v842 = vunpack.c.l.b16 %v201
    %v843 = vunpack.c.h.b16 %v201
    %v844 = vunpack.c.l.b16 %v202
    %v845 = vunpack.c.h.b16 %v202
    %v846 = vunpack.c.l.b16 %v203
    %v847 = vunpack.c.h.b16 %v203
    %v848 = vunpack.c.l.b16 %v204
    %v849 = vunpack.c.h.b16 %v204
    %v850 = vunpack.c.l.b16 %v205
    %v851 = vunpack.c.h.b16 %v205
    %v852 = vunpack.c.l.b16 %v206
    %v853 = vunpack.c.h.b16 %v206
    %v854 = vunpack.c.l.b16 %v207
    %v855 = vunpack.c.h.b16 %v207
    %v856 = vunpack.c.l.b16 %v208
    %v857 = vunpack.c.h.b16 %v208
    %v858 = vunpack.c.l.b16 %v209
    %v859 = vunpack.c.h.b16 %v209
    %v860 = vunpack.c.l.b16 %v210
    %v861 = vunpack.c.h.b16 %v210
    %v862 = vunpack.c.l.b16 %v211
    %v863 = vunpack.c.h.b16 %v211
    %v864 = vunpack.c.l.b16 %v212
    %v865 = vunpack.c.h.b16 %v212
    %v866 = vunpack.c.l.b16 %v213
    %v867 = vunpack.c.h.b16 %v213
    %v868 = vunpack.c.l.b16 %v214
    %v869 = vunpack.c.h.b16 %v214
    %v870 = vunpack.c.l.b16 %v215
    %v871 = vunpack.c.h.b16 %v215
    %v872 = vunpack.c.l.b16 %v216
    %v873 = vunpack.c.h.b16 %v216
    %v874 = vunpack.c.l.b16 %v217
    %v875 = vunpack.c.h.b16 %v217
    %v876 = vunpack.c.l.b16 %v218
    %v877 = vunpack.c.h.b16 %v218
    %v878 = vunpack.c.l.b16 %v219
    %v879 = vunpack.c.h.b16 %v219
    %v880 = vunpack.c.l.b16 %v220
    %v881 = vunpack.c.h.b16 %v220
    %v882 = vunpack.c.l.b16 %v221
    %v883 = vunpack.c.h.b16 %v221
    %v884 = vunpack.c.l.b16 %v222
    %v885 = vunpack.c.h.b16 %v222
    %v886 = vunpack.c.l.b16 %v223
    %v887 = vunpack.c.h.b16 %v223
    %v888 = vunpack.c.l.b16 %v224
    %v889 = vunpack.c.h.b16 %v224
    %v890 = vunpack.c.l.b16 %v225
    %v891 = vunpack.c.h.b16 %v225
    %v892 = vunpack.c.l.b16 %v226
    %v893 = vunpack.c.h.b16 %v226
    %v894 = vunpack.c.l.b16 %v227
    %v895 = vunpack.c.h.b16 %v227
    %v896 = vunpack.c.l.b16 %v228
    %v897 = vunpack.c.h.b16 %v228
    %v898 = vunpack.c.l.b16 %v229
    %v899 = vunpack.c.h.b16 %v229
    %v900 = vunpack.c.l.b16 %v230
    %v901 = vunpack.c.h.b16 %v230
    %v902 = vunpack.c.l.b16 %v231
    %v903 = vunpack.c.h.b16 %v231
    %v904 = vunpack.c.l.b16 %v232
    %v905 = vunpack.c.h.b16 %v232
    %v906 = vunpack.c.l.b16 %v233
    %v907 = vunpack.c.h.b16 %v233
    %v908 = vunpack.c.l.b16 %v234
    %v909 = vunpack.c.h.b16 %v234
    %v910 = vunpack.c.l.b16 %v235
    %v911 = vunpack.c.h.b16 %v235
    %v912 = vunpack.c.l.b16 %v236
    %v913 = vunpack.c.h.b16 %v236
    %v914 = vunpack.c.l.b16 %v237
    %v915 = vunpack.c.h.b16 %v237
    %v916 = vunpack.c.l.b16 %v238
    %v917 = vunpack.c.h.b16 %v238
    %v918 = vunpack.c.l.b16 %v239
    %v919 = vunpack.c.h.b16 %v239
    %v920 = vunpack.c.l.b16 %v240
    %v921 = vunpack.c.h.b16 %v240
    %v922 = vunpack.c.l.b16 %v241
    %v923 = vunpack.c.h.b16 %v241
    %v924 = vunpack.c.l.b16 %v242
    %v925 = vunpack.c.h.b16 %v242
    %v926 = vunpack.c.l.b16 %v243
    %v927 = vunpack.c.h.b16 %v243
    %v928 = vunpack.c.l.b16 %v244
    %v929 = vunpack.c.h.b16 %v244
    %v930 = vunpack.c.l.b16 %v245
    %v931 = vunpack.c.h.b16 %v245
    %v932 = vunpack.c.l.b16 %v246
    %v933 = vunpack.c.h.b16 %v246
    %v934 = vunpack.c.l.b16 %v247
    %v935 = vunpack.c.h.b16 %v247
    %v936 = vunpack.c.l.b16 %v248
    %v937 = vunpack.c.h.b16 %v248
    %v938 = vunpack.c.l.b16 %v249
    %v939 = vunpack.c.h.b16 %v249
    %v940 = vunpack.c.l.b16 %v250
    %v941 = vunpack.c.h.b16 %v250
    %v942 = vunpack.c.l.b16 %v251
    %v943 = vunpack.c.h.b16 %v251
    %v944 = vunpack.c.l.b16 %v252
    %v945 = vunpack.c.h.b16 %v252
    %v946 = vunpack.c.l.b16 %v253
    %v947 = vunpack.c.h.b16 %v253
    %v948 = vunpack.c.l.b16 %v254
    %v949 = vunpack.c.h.b16 %v254
    %v950 = vunpack.c.l.b16 %v255
    %v951 = vunpack.c.h.b16 %v255
    %v952 = vunpack.c.l.b16 %v256
    %v953 = vunpack.c.h.b16 %v256
    %v954 = vunpack.c.l.b16 %v257
    %v955 = vunpack.c.h.b16 %v257
    %v956 = vunpack.c.l.b16 %v258
    %v957 = vunpack.c.h.b16 %v258
    %v958 = vunpack.c.l.b16 %v259
    %v959 = vunpack.c.h.b16 %v259
    %v960 = vunpack.c.l.b16 %v260
    %v961 = vunpack.c.h.b16 %v260
    %v962 = vunpack.c.l.b16 %v261
    %v963 = vunpack.c.h.b16 %v261
    %v964 = vunpack.c.l.b16 %v262
    %v965 = vunpack.c.h.b16 %v262
    %v966 = vunpack.c.l.b16 %v263
    %v967 = vunpack.c.h.b16 %v263
    %v968 = vunpack.c.l.b16 %v264
    %v969 = vunpack.c.h.b16 %v264
    %v970 = vunpack.c.l.b16 %v265
    %v971 = vunpack.c.h.b16 %v265
    %v972 = vunpack.c.l.b16 %v266
    %v973 = vunpack.c.h.b16 %v266
    %v974 = vunpack.c.l.b16 %v267
    %v975 = vunpack.c.h.b16 %v267
    %v976 = vunpack.c.l.b16 %v268
    %v977 = vunpack.c.h.b16 %v268
    %v978 = vunpack.c.l.b16 %v269
    %v979 = vunpack.c.h.b16 %v269
    %v980 = vunpack.c.l.b16 %v270
    %v981 = vunpack.c.h.b16 %v270
    %v982 = vunpack.c.l.b16 %v271
    %v983 = vunpack.c.h.b16 %v271
    %v984 = vunpack.c.l.b16 %v272
    %v985 = vunpack.c.h.b16 %v272
    %v986 = vunpack.c.l.b16 %v273
    %v987 = vunpack.c.h.b16 %v273
    %v988 = vunpack.c.l.b16 %v274
    %v989 = vunpack.c.h.b16 %v274
    %v990 = vunpack.c.l.b16 %v275
    %v991 = vunpack.c.h.b16 %v275
    %v992 = vunpack.c.l.b16 %v276
    %v993 = vunpack.c.h.b16 %v276
    %v994 = vunpack.c.l.b16 %v277
    %v995 = vunpack.c.h.b16 %v277
    %v996 = vunpack.c.l.b16 %v278
    %v997 = vunpack.c.h.b16 %v278
    %v998 = vunpack.c.l.b16 %v279
    %v999 = vunpack.c.h.b16 %v279
    %v1000 = vunpack.c.l.b16 %v280
    %v1001 = vunpack.c.h.b16 %v280
    %v1002 = vunpack.c.l.b16 %v281
    %v1003 = vunpack.c.h.b16 %v281
    %v1004 = vunpack.c.l.b16 %v282
    %v1005 = vunpack.c.h.b16 %v282
    %v1006 = vunpack.c.l.b16 %v283
    %v1007 = vunpack.c.h.b16 %v283
    %v1008 = vunpack.c.l.b16 %v284
    %v1009 = vunpack.c.h.b16 %v284
    %v1010 = vunpack.c.l.b16 %v285
    %v1011 = vunpack.c.h.b16 %v285
    %v1012 = vunpack.c.l.b16 %v286
    %v1013 = vunpack.c.h.b16 %v286
    %v1014 = vunpack.c.l.b16 %v287
    %v1015 = vunpack.c.h.b16 %v287
    %v1016 = vunpack.c.l.b16 %v288
    %v1017 = vunpack.c.h.b16 %v288
    %v1018 = vunpack.c.l.b16 %v289
    %v1019 = vunpack.c.h.b16 %v289
    %v1020 = vunpack.c.l.b16 %v290
    %v1021 = vunpack.c.h.b16 %v290
    %v1022 = vunpack.c.l.b16 %v291
    %v1023 = vunpack.c.h.b16 %v291
    %v1024 = vunpack.c.l.b16 %v292
    %v1025 = vunpack.c.h.b16 %v292
    %v1026 = vunpack.c.l.b16 %v293
    %v1027 = vunpack.c.h.b16 %v293
    %v1028 = vunpack.c.l.b16 %v294
    %v1029 = vunpack.c.h.b16 %v294
    %v1030 = vunpack.c.l.b16 %v295
    %v1031 = vunpack.c.h.b16 %v295
    %v1032 = vunpack.c.l.b16 %v296
    %v1033 = vunpack.c.h.b16 %v296
    %v1034 = vunpack.c.l.b16 %v297
    %v1035 = vunpack.c.h.b16 %v297
    %v1036 = vunpack.c.l.b16 %v298
    %v1037 = vunpack.c.h.b16 %v298
    %v1038 = vunpack.c.l.b16 %v299
    %v1039 = vunpack.c.h.b16 %v299
    %v1040 = vunpack.c.l.b16 %v300
    %v1041 = vunpack.c.h.b16 %v300
    %v1042 = vunpack.c.l.b16 %v301
    %v1043 = vunpack.c.h.b16 %v301
    %v1044 = vunpack.c.l.b16 %v302
    %v1045 = vunpack.c.h.b16 %v302
    %v1046 = vunpack.c.l.b16 %v303
    %v1047 = vunpack.c.h.b16 %v303
    %v1048 = vunpack.c.l.b16 %v304
    %v1049 = vunpack.c.h.b16 %v304
    %v1050 = vunpack.c.l.b16 %v305
    %v1051 = vunpack.c.h.b16 %v305
    %v1052 = vunpack.c.l.b16 %v306
    %v1053 = vunpack.c.h.b16 %v306
    %v1054 = vunpack.c.l.b16 %v307
    %v1055 = vunpack.c.h.b16 %v307
    %v1056 = vunpack.c.l.b16 %v308
    %v1057 = vunpack.c.h.b16 %v308
    %v1058 = vunpack.c.l.b16 %v309
    %v1059 = vunpack.c.h.b16 %v309
    %v1060 = vunpack.c.l.b16 %v310
    %v1061 = vunpack.c.h.b16 %v310
    %v1062 = vunpack.c.l.b16 %v311
    %v1063 = vunpack.c.h.b16 %v311
    %v1064 = vunpack.c.l.b16 %v312
    %v1065 = vunpack.c.h.b16 %v312
    %v1066 = vunpack.c.l.b16 %v313
    %v1067 = vunpack.c.h.b16 %v313
    %v1068 = vunpack.c.l.b16 %v314
    %v1069 = vunpack.c.h.b16 %v314
    %v1070 = vunpack.c.l.b16 %v315
    %v1071 = vunpack.c.h.b16 %v315
    %v1072 = vunpack.c.l.b16 %v316
    %v1073 = vunpack.c.h.b16 %v316
    %v1074 = vunpack.c.l.b16 %v317
    %v1075 = vunpack.c.h.b16 %v317
    %v1076 = vunpack.c.l.b16 %v318
    %v1077 = vunpack.c.h.b16 %v318
    %v1078 = vunpack.c.l.b16 %v319
    %v1079 = vunpack.c.h.b16 %v319
    %v1080 = vunpack.c.l.b16 %v320
    %v1081 = vunpack.c.h.b16 %v320
    %v1082 = vunpack.c.l.b16 %v321
    %v1083 = vunpack.c.h.b16 %v321
    %v1084 = vunpack.c.l.b16 %v322
    %v1085 = vunpack.c.h.b16 %v322
    %v1086 = vunpack.c.l.b16 %v323
    %v1087 = vunpack.c.h.b16 %v323
    %v1088 = vunpack.c.l.b16 %v324
    %v1089 = vunpack.c.h.b16 %v324
    %v1090 = vunpack.c.l.b16 %v325
    %v1091 = vunpack.c.h.b16 %v325
    %v1092 = vunpack.c.l.b16 %v326
    %v1093 = vunpack.c.h.b16 %v326
    %v1094 = vunpack.c.l.b16 %v327
    %v1095 = vunpack.c.h.b16 %v327
    %v1096 = vunpack.c.l.b16 %v328
    %v1097 = vunpack.c.h.b16 %v328
    %v1098 = vunpack.c.l.b16 %v329
    %v1099 = vunpack.c.h.b16 %v329
    %v1100 = vunpack.c.l.b16 %v330
    %v1101 = vunpack.c.h.b16 %v330
    %v1102 = vunpack.c.l.b16 %v331
    %v1103 = vunpack.c.h.b16 %v331
    %v1104 = vunpack.c.l.b16 %v332
    %v1105 = vunpack.c.h.b16 %v332
    %v1106 = vunpack.c.l.b16 %v333
    %v1107 = vunpack.c.h.b16 %v333
    %v1108 = vunpack.c.l.b16 %v334
    %v1109 = vunpack.c.h.b16 %v334
    %v1110 = vunpack.c.l.b16 %v335
    %v1111 = vunpack.c.h.b16 %v335
    %v1112 = vunpack.c.l.b16 %v336
    %v1113 = vunpack.c.h.b16 %v336
    %v1114 = vpack.c.b16 %v606, %v602
    %v1115 = vpack.c.b16 %v607, %v603
    %v1116 = vpack.c.b16 %v608, %v604
    %v1117 = vpack.c.b16 %v609, %v605
    %v1118 = vpack.c.b16 %v614, %v610
    %v1119 = vpack.c.b16 %v615, %v611
    %v1120 = vpack.c.b16 %v616, %v612
    %v1121 = vpack.c.b16 %v617, %v613
    %v1122 = vpack.c.b16 %v622, %v618
    %v1123 = vpack.c.b16 %v623, %v619
    %v1124 = vpack.c.b16 %v624, %v620
    %v1125 = vpack.c.b16 %v625, %v621
    %v1126 = vpack.c.b16 %v630, %v626
    %v1127 = vpack.c.b16 %v631, %v627
    %v1128 = vpack.c.b16 %v632, %v628
    %v1129 = vpack.c.b16 %v633, %v629
    %v1130 = vpack.c.b16 %v638, %v634
    %v1131 = vpack.c.b16 %v639, %v635
    %v1132 = vpack.c.b16 %v640, %v636
    %v1133 = vpack.c.b16 %v641, %v637
    %v1134 = vpack.c.b16 %v646, %v642
    %v1135 = vpack.c.b16 %v647, %v643
    %v1136 = vpack.c.b16 %v648, %v644
    %v1137 = vpack.c.b16 %v649, %v645
    %v1138 = vpack.c.b16 %v654, %v650
    %v1139 = vpack.c.b16 %v655, %v651
    %v1140 = vpack.c.b16 %v656, %v652
    %v1141 = vpack.c.b16 %v657, %v653
    %v1142 = vpack.c.b16 %v662, %v658
    %v1143 = vpack.c.b16 %v663, %v659
    %v1144 = vpack.c.b16 %v664, %v660
    %v1145 = vpack.c.b16 %v665, %v661
    %v1146 = vpack.c.b16 %v670, %v666
    %v1147 = vpack.c.b16 %v671, %v667
    %v1148 = vpack.c.b16 %v672, %v668
    %v1149 = vpack.c.b16 %v673, %v669
    %v1150 = vpack.c.b16 %v678, %v674
    %v1151 = vpack.c.b16 %v679, %v675
    %v1152 = vpack.c.b16 %v680, %v676
    %v1153 = vpack.c.b16 %v681, %v677
    %v1154 = vpack.c.b16 %v686, %v682
    %v1155 = vpack.c.b16 %v687, %v683
    %v1156 = vpack.c.b16 %v688, %v684
    %v1157 = vpack.c.b16 %v689, %v685
    %v1158 = vpack.c.b16 %v694, %v690
    %v1159 = vpack.c.b16 %v695, %v691
    %v1160 = vpack.c.b16 %v696, %v692
    %v1161 = vpack.c.b16 %v697, %v693
    %v1162 = vpack.c.b16 %v702, %v698
    %v1163 = vpack.c.b16 %v703, %v699
    %v1164 = vpack.c.b16 %v704, %v700
    %v1165 = vpack.c.b16 %v705, %v701
    %v1166 = vpack.c.b16 %v710, %v706
    %v1167 = vpack.c.b16 %v711, %v707
    %v1168 = vpack.c.b16 %v712, %v708
    %v1169 = vpack.c.b16 %v713, %v709
    %v1170 = vpack.c.b16 %v718, %v714
    %v1171 = vpack.c.b16 %v719, %v715
    %v1172 = vpack.c.b16 %v720, %v716
    %v1173 = vpack.c.b16 %v721, %v717
    %v1174 = vpack.c.b16 %v726, %v722
    %v1175 = vpack.c.b16 %v727, %v723
    %v1176 = vpack.c.b16 %v728, %v724
    %v1177 = vpack.c.b16 %v729, %v725
    %v1178 = vpack.c.b16 %v734, %v730
    %v1179 = vpack.c.b16 %v735, %v731
    %v1180 = vpack.c.b16 %v736, %v732
    %v1181 = vpack.c.b16 %v737, %v733
    %v1182 = vpack.c.b16 %v742, %v738
    %v1183 = vpack.c.b16 %v743, %v739
    %v1184 = vpack.c.b16 %v744, %v740
    %v1185 = vpack.c.b16 %v745, %v741
    %v1186 = vpack.c.b16 %v750, %v746
    %v1187 = vpack.c.b16 %v751, %v747
    %v1188 = vpack.c.b16 %v752, %v748
    %v1189 = vpack.c.b16 %v753, %v749
    %v1190 = vpack.c.b16 %v758, %v754
    %v1191 = vpack.c.b16 %v759, %v755
    %v1192 = vpack.c.b16 %v760, %v756
    %v1193 = vpack.c.b16 %v761, %v757
    %v1194 = vpack.c.b16 %v766, %v762
    %v1195 = vpack.c.b16 %v767, %v763
    %v1196 = vpack.c.b16 %v768, %v764
    %v1197 = vpack.c.b16 %v769, %v765
    %v1198 = vpack.c.b16 %v774, %v770
    %v1199 = vpack.c.b16 %v775, %v771
    %v1200 = vpack.c.b16 %v776, %v772
    %v1201 = vpack.c.b16 %v777, %v773
    %v1202 = vpack.c.b16 %v782, %v778
    %v1203 = vpack.c.b16 %v783, %v779
    %v1204 = vpack.c.b16 %v784, %v780
    %v1205 = vpack.c.b16 %v785, %v781
    %v1206 = vpack.c.b16 %v790, %v786
    %v1207 = vpack.c.b16 %v791, %v787
    %v1208 = vpack.c.b16 %v792, %v788
    %v1209 = vpack.c.b16 %v793, %v789
    %v1210 = vpack.c.b16 %v798, %v794
    %v1211 = vpack.c.b16 %v799, %v795
    %v1212 = vpack.c.b16 %v800, %v796
    %v1213 = vpack.c.b16 %v801, %v797
    %v1214 = vpack.c.b16 %v806, %v802
    %v1215 = vpack.c.b16 %v807, %v803
    %v1216 = vpack.c.b16 %v808, %v804
    %v1217 = vpack.c.b16 %v809, %v805
    %v1218 = vpack.c.b16 %v814, %v810
    %v1219 = vpack.c.b16 %v815, %v811
    %v1220 = vpack.c.b16 %v816, %v812
    %v1221 = vpack.c.b16 %v817, %v813
    %v1222 = vpack.c.b16 %v822, %v818
    %v1223 = vpack.c.b16 %v823, %v819
    %v1224 = vpack.c.b16 %v824, %v820
    %v1225 = vpack.c.b16 %v825, %v821
    %v1226 = vpack.c.b16 %v830, %v826
    %v1227 = vpack.c.b16 %v831, %v827
    %v1228 = vpack.c.b16 %v832, %v828
    %v1229 = vpack.c.b16 %v833, %v829
    %v1230 = vpack.c.b16 %v838, %v834
    %v1231 = vpack.c.b16 %v839, %v835
    %v1232 = vpack.c.b16 %v840, %v836
    %v1233 = vpack.c.b16 %v841, %v837
    %v1234 = vpack.c.b16 %v846, %v842
    %v1235 = vpack.c.b16 %v847, %v843
    %v1236 = vpack.c.b16 %v848, %v844
    %v1237 = vpack.c.b16 %v849, %v845
    %v1238 = vpack.c.b16 %v854, %v850
    %v1239 = vpack.c.b16 %v855, %v851
    %v1240 = vpack.c.b16 %v856, %v852
    %v1241 = vpack.c.b16 %v857, %v853
    %v1242 = vpack.c.b16 %v862, %v858
    %v1243 = vpack.c.b16 %v863, %v859
    %v1244 = vpack.c.b16 %v864, %v860
    %v1245 = vpack.c.b16 %v865, %v861
    %v1246 = vpack.c.b16 %v870, %v866
    %v1247 = vpack.c.b16 %v871, %v867
    %v1248 = vpack.c.b16 %v872, %v868
    %v1249 = vpack.c.b16 %v873, %v869
    %v1250 = vpack.c.b16 %v878, %v874
    %v1251 = vpack.c.b16 %v879, %v875
    %v1252 = vpack.c.b16 %v880, %v876
    %v1253 = vpack.c.b16 %v881, %v877
    %v1254 = vpack.c.b16 %v886, %v882
    %v1255 = vpack.c.b16 %v887, %v883
    %v1256 = vpack.c.b16 %v888, %v884
    %v1257 = vpack.c.b16 %v889, %v885
    %v1258 = vpack.c.b16 %v894, %v890
    %v1259 = vpack.c.b16 %v895, %v891
    %v1260 = vpack.c.b16 %v896, %v892
    %v1261 = vpack.c.b16 %v897, %v893
    %v1262 = vpack.c.b16 %v902, %v898
    %v1263 = vpack.c.b16 %v903, %v899
    %v1264 = vpack.c.b16 %v904, %v900
    %v1265 = vpack.c.b16 %v905, %v901
    %v1266 = vpack.c.b16 %v910, %v906
    %v1267 = vpack.c.b16 %v911, %v907
    %v1268 = vpack.c.b16 %v912, %v908
    %v1269 = vpack.c.b16 %v913, %v909
    %v1270 = vpack.c.b16 %v918, %v914
    %v1271 = vpack.c.b16 %v919, %v915
    %v1272 = vpack.c.b16 %v920, %v916
    %v1273 = vpack.c.b16 %v921, %v917
    %v1274 = vpack.c.b16 %v926, %v922
    %v1275 = vpack.c.b16 %v927, %v923
    %v1276 = vpack.c.b16 %v928, %v924
    %v1277 = vpack.c.b16 %v929, %v925
    %v1278 = vpack.c.b16 %v934, %v930
    %v1279 = vpack.c.b16 %v935, %v931
    %v1280 = vpack.c.b16 %v936, %v932
    %v1281 = vpack.c.b16 %v937, %v933
    %v1282 = vpack.c.b16 %v942, %v938
    %v1283 = vpack.c.b16 %v943, %v939
    %v1284 = vpack.c.b16 %v944, %v940
    %v1285 = vpack.c.b16 %v945, %v941
    %v1286 = vpack.c.b16 %v950, %v946
    %v1287 = vpack.c.b16 %v951, %v947
    %v1288 = vpack.c.b16 %v952, %v948
    %v1289 = vpack.c.b16 %v953, %v949
    %v1290 = vpack.c.b16 %v958, %v954
    %v1291 = vpack.c.b16 %v959, %v955
    %v1292 = vpack.c.b16 %v960, %v956
    %v1293 = vpack.c.b16 %v961, %v957
    %v1294 = vpack.c.b16 %v966, %v962
    %v1295 = vpack.c.b16 %v967, %v963
    %v1296 = vpack.c.b16 %v968, %v964
    %v1297 = vpack.c.b16 %v969, %v965
    %v1298 = vpack.c.b16 %v974, %v970
    %v1299 = vpack.c.b16 %v975, %v971
    %v1300 = vpack.c.b16 %v976, %v972
    %v1301 = vpack.c.b16 %v977, %v973
    %v1302 = vpack.c.b16 %v982, %v978
    %v1303 = vpack.c.b16 %v983, %v979
    %v1304 = vpack.c.b16 %v984, %v980
    %v1305 = vpack.c.b16 %v985, %v981
    %v1306 = vpack.c.b16 %v990, %v986
    %v1307 = vpack.c.b16 %v991, %v987
    %v1308 = vpack.c.b16 %v992, %v988
    %v1309 = vpack.c.b16 %v993, %v989
    %v1310 = vpack.c.b16 %v998, %v994
    %v1311 = vpack.c.b16 %v999, %v995
    %v1312 = vpack.c.b16 %v1000, %v996
    %v1313 = vpack.c.b16 %v1001, %v997
    %v1314 = vpack.c.b16 %v1006, %v1002
    %v1315 = vpack.c.b16 %v1007, %v1003
    %v1316 = vpack.c.b16 %v1008, %v1004
    %v1317 = vpack.c.b16 %v1009, %v1005
    %v1318 = vpack.c.b16 %v1014, %v1010
    %v1319 = vpack.c.b16 %v1015, %v1011
    %v1320 = vpack.c.b16 %v1016, %v1012
    %v1321 = vpack.c.b16 %v1017, %v1013
    %v1322 = vpack.c.b16 %v1022, %v1018
    %v1323 = vpack.c.b16 %v1023, %v1019
    %v1324 = vpack.c.b16 %v1024, %v1020
    %v1325 = vpack.c.b16 %v1025, %v1021
    %v1326 = vpack.c.b16 %v1030, %v1026
    %v1327 = vpack.c.b16 %v1031, %v1027
    %v1328 = vpack.c.b16 %v1032, %v1028
    %v1329 = vpack.c.b16 %v1033, %v1029
    %v1330 = vpack.c.b16 %v1038, %v1034
    %v1331 = vpack.c.b16 %v1039, %v1035
    %v1332 = vpack.c.b16 %v1040, %v1036
    %v1333 = vpack.c.b16 %v1041, %v1037
    %v1334 = vpack.c.b16 %v1046, %v1042
    %v1335 = vpack.c.b16 %v1047, %v1043
    %v1336 = vpack.c.b16 %v1048, %v1044
    %v1337 = vpack.c.b16 %v1049, %v1045
    %v1338 = vpack.c.b16 %v1054, %v1050
    %v1339 = vpack.c.b16 %v1055, %v1051
    %v1340 = vpack.c.b16 %v1056, %v1052
    %v1341 = vpack.c.b16 %v1057, %v1053
    %v1342 = vpack.c.b16 %v1062, %v1058
    %v1343 = vpack.c.b16 %v1063, %v1059
    %v1344 = vpack.c.b16 %v1064, %v1060
    %v1345 = vpack.c.b16 %v1065, %v1061
    %v1346 = vpack.c.b16 %v1070, %v1066
    %v1347 = vpack.c.b16 %v1071, %v1067
    %v1348 = vpack.c.b16 %v1072, %v1068
    %v1349 = vpack.c.b16 %v1073, %v1069
    %v1350 = vpack.c.b16 %v1078, %v1074
    %v1351 = vpack.c.b16 %v1079, %v1075
    %v1352 = vpack.c.b16 %v1080, %v1076
    %v1353 = vpack.c.b16 %v1081, %v1077
    %v1354 = vpack.c.b16 %v1086, %v1082
    %v1355 = vpack.c.b16 %v1087, %v1083
    %v1356 = vpack.c.b16 %v1088, %v1084
    %v1357 = vpack.c.b16 %v1089, %v1085
    %v1358 = vpack.c.b16 %v1094, %v1090
    %v1359 = vpack.c.b16 %v1095, %v1091
    %v1360 = vpack.c.b16 %v1096, %v1092
    %v1361 = vpack.c.b16 %v1097, %v1093
    %v1362 = vpack.c.b16 %v1102, %v1098
    %v1363 = vpack.c.b16 %v1103, %v1099
    %v1364 = vpack.c.b16 %v1104, %v1100
    %v1365 = vpack.c.b16 %v1105, %v1101
    %v1366 = vpack.c.b16 %v1110, %v1106
    %v1367 = vpack.c.b16 %v1111, %v1107
    %v1368 = vpack.c.b16 %v1112, %v1108
    %v1369 = vpack.c.b16 %v1113, %v1109
    %1626 = vmatpush.bf16.msra.mxu0 %v1142
    %1627 = vmatpush.bf16.msra.mxu0 %v1138
    %1628 = vmatpush.bf16.msra.mxu0 %v1134
    %1629 = vmatpush.bf16.msra.mxu0 %v1130
    %1630 = vmatpush.bf16.msra.mxu0 %v1126
    %1631 = vmatpush.bf16.msra.mxu0 %v1122
    %1632 = vmatpush.bf16.msra.mxu0 %v1118
    %1633 = vmatpush.bf16.msra.mxu0 %v1114
    %1634 = vmatmul.bf16.gmra.mxu0 %v73
    %v1635 = vpop.f32.mrf.mxu0
    %v1636 = vadd.f32 %v338, %v1635
    %v1637 = vpop.f32.mrf.mxu0
    %1638 = vdwg.mxu0
    %1639 = vmatpush.bf16.msra.mxu0 %v1174
    %1640 = vmatpush.bf16.msra.mxu0 %v1170
    %1641 = vmatpush.bf16.msra.mxu0 %v1166
    %1642 = vmatpush.bf16.msra.mxu0 %v1162
    %1643 = vmatpush.bf16.msra.mxu0 %v1158
    %1644 = vmatpush.bf16.msra.mxu0 %v1154
    %1645 = vmatpush.bf16.msra.mxu0 %v1150
    %1646 = vmatpush.bf16.msra.mxu0 %v1146
    %1647 = vmatmul.bf16.gmra.mxu0 %v74
    %v1648 = vpop.f32.mrf.mxu0
    %v1649 = vadd.f32 %v1636, %v1648
    %v1650 = vpop.f32.mrf.mxu0
    %1651 = vdwg.mxu0
    %1652 = vmatpush.bf16.msra.mxu0 %v1206
    %1653 = vmatpush.bf16.msra.mxu0 %v1202
    %1654 = vmatpush.bf16.msra.mxu0 %v1198
    %1655 = vmatpush.bf16.msra.mxu0 %v1194
    %1656 = vmatpush.bf16.msra.mxu0 %v1190
    %1657 = vmatpush.bf16.msra.mxu0 %v1186
    %1658 = vmatpush.bf16.msra.mxu0 %v1182
    %1659 = vmatpush.bf16.msra.mxu0 %v1178
    %1660 = vmatmul.bf16.gmra.mxu0 %v75
    %v1661 = vpop.f32.mrf.mxu0
    %v1662 = vadd.f32 %v1649, %v1661
    %v1663 = vpop.f32.mrf.mxu0
    %1664 = vdwg.mxu0
    %1665 = vmatpush.bf16.msra.mxu0 %v1238
    %1666 = vmatpush.bf16.msra.mxu0 %v1234
    %1667 = vmatpush.bf16.msra.mxu0 %v1230
    %1668 = vmatpush.bf16.msra.mxu0 %v1226
    %1669 = vmatpush.bf16.msra.mxu0 %v1222
    %1670 = vmatpush.bf16.msra.mxu0 %v1218
    %1671 = vmatpush.bf16.msra.mxu0 %v1214
    %1672 = vmatpush.bf16.msra.mxu0 %v1210
    %1673 = vmatmul.bf16.gmra.mxu0 %v76
    %v1674 = vpop.f32.mrf.mxu0
    %v1675 = vadd.f32 %v1662, %v1674
    %v1676 = vpop.f32.mrf.mxu0
    %1677 = vdwg.mxu0
    %1678 = vmatpush.bf16.msra.mxu0 %v1270
    %1679 = vmatpush.bf16.msra.mxu0 %v1266
    %1680 = vmatpush.bf16.msra.mxu0 %v1262
    %1681 = vmatpush.bf16.msra.mxu0 %v1258
    %1682 = vmatpush.bf16.msra.mxu0 %v1254
    %1683 = vmatpush.bf16.msra.mxu0 %v1250
    %1684 = vmatpush.bf16.msra.mxu0 %v1246
    %1685 = vmatpush.bf16.msra.mxu0 %v1242
    %1686 = vmatmul.bf16.gmra.mxu0 %v77
    %v1687 = vpop.f32.mrf.mxu0
    %v1688 = vadd.f32 %v1675, %v1687
    %v1689 = vpop.f32.mrf.mxu0
    %1690 = vdwg.mxu0
    %1691 = vmatpush.bf16.msra.mxu0 %v1302
    %1692 = vmatpush.bf16.msra.mxu0 %v1298
    %1693 = vmatpush.bf16.msra.mxu0 %v1294
    %1694 = vmatpush.bf16.msra.mxu0 %v1290
    %1695 = vmatpush.bf16.msra.mxu0 %v1286
    %1696 = vmatpush.bf16.msra.mxu0 %v1282
    %1697 = vmatpush.bf16.msra.mxu0 %v1278
    %1698 = vmatpush.bf16.msra.mxu0 %v1274
    %1699 = vmatmul.bf16.gmra.mxu0 %v78
    %v1700 = vpop.f32.mrf.mxu0
    %v1701 = vadd.f32 %v1688, %v1700
    %v1702 = vpop.f32.mrf.mxu0
    %1703 = vdwg.mxu0
    %1704 = vmatpush.bf16.msra.mxu0 %v1334
    %1705 = vmatpush.bf16.msra.mxu0 %v1330
    %1706 = vmatpush.bf16.msra.mxu0 %v1326
    %1707 = vmatpush.bf16.msra.mxu0 %v1322
    %1708 = vmatpush.bf16.msra.mxu0 %v1318
    %1709 = vmatpush.bf16.msra.mxu0 %v1314
    %1710 = vmatpush.bf16.msra.mxu0 %v1310
    %1711 = vmatpush.bf16.msra.mxu0 %v1306
    %1712 = vmatmul.bf16.gmra.mxu0 %v79
    %v1713 = vpop.f32.mrf.mxu0
    %v1714 = vadd.f32 %v1701, %v1713
    %v1715 = vpop.f32.mrf.mxu0
    %1716 = vdwg.mxu0
    %1717 = vmatpush.bf16.msra.mxu0 %v1366
    %1718 = vmatpush.bf16.msra.mxu0 %v1362
    %1719 = vmatpush.bf16.msra.mxu0 %v1358
    %1720 = vmatpush.bf16.msra.mxu0 %v1354
    %1721 = vmatpush.bf16.msra.mxu0 %v1350
    %1722 = vmatpush.bf16.msra.mxu0 %v1346
    %1723 = vmatpush.bf16.msra.mxu0 %v1342
    %1724 = vmatpush.bf16.msra.mxu0 %v1338
    %1725 = vmatmul.bf16.gmra.mxu0 %v80
    %v1726 = vpop.f32.mrf.mxu0
    %v1727 = vadd.f32 %v1714, %v1726
    %v1728 = vpop.f32.mrf.mxu0
    %1729 = vdwg.mxu0
    %1730 = vmatpush.bf16.msra.mxu0 %v1143
    %1731 = vmatpush.bf16.msra.mxu0 %v1139
    %1732 = vmatpush.bf16.msra.mxu0 %v1135
    %1733 = vmatpush.bf16.msra.mxu0 %v1131
    %1734 = vmatpush.bf16.msra.mxu0 %v1127
    %1735 = vmatpush.bf16.msra.mxu0 %v1123
    %1736 = vmatpush.bf16.msra.mxu0 %v1119
    %1737 = vmatpush.bf16.msra.mxu0 %v1115
    %1738 = vmatmul.bf16.gmra.mxu0 %v73
    %v1739 = vpop.f32.mrf.mxu0
    %v1740 = vadd.f32 %v339, %v1739
    %v1741 = vpop.f32.mrf.mxu0
    %1742 = vdwg.mxu0
    %1743 = vmatpush.bf16.msra.mxu0 %v1175
    %1744 = vmatpush.bf16.msra.mxu0 %v1171
    %1745 = vmatpush.bf16.msra.mxu0 %v1167
    %1746 = vmatpush.bf16.msra.mxu0 %v1163
    %1747 = vmatpush.bf16.msra.mxu0 %v1159
    %1748 = vmatpush.bf16.msra.mxu0 %v1155
    %1749 = vmatpush.bf16.msra.mxu0 %v1151
    %1750 = vmatpush.bf16.msra.mxu0 %v1147
    %1751 = vmatmul.bf16.gmra.mxu0 %v74
    %v1752 = vpop.f32.mrf.mxu0
    %v1753 = vadd.f32 %v1740, %v1752
    %v1754 = vpop.f32.mrf.mxu0
    %1755 = vdwg.mxu0
    %1756 = vmatpush.bf16.msra.mxu0 %v1207
    %1757 = vmatpush.bf16.msra.mxu0 %v1203
    %1758 = vmatpush.bf16.msra.mxu0 %v1199
    %1759 = vmatpush.bf16.msra.mxu0 %v1195
    %1760 = vmatpush.bf16.msra.mxu0 %v1191
    %1761 = vmatpush.bf16.msra.mxu0 %v1187
    %1762 = vmatpush.bf16.msra.mxu0 %v1183
    %1763 = vmatpush.bf16.msra.mxu0 %v1179
    %1764 = vmatmul.bf16.gmra.mxu0 %v75
    %v1765 = vpop.f32.mrf.mxu0
    %v1766 = vadd.f32 %v1753, %v1765
    %v1767 = vpop.f32.mrf.mxu0
    %1768 = vdwg.mxu0
    %1769 = vmatpush.bf16.msra.mxu0 %v1239
    %1770 = vmatpush.bf16.msra.mxu0 %v1235
    %1771 = vmatpush.bf16.msra.mxu0 %v1231
    %1772 = vmatpush.bf16.msra.mxu0 %v1227
    %1773 = vmatpush.bf16.msra.mxu0 %v1223
    %1774 = vmatpush.bf16.msra.mxu0 %v1219
    %1775 = vmatpush.bf16.msra.mxu0 %v1215
    %1776 = vmatpush.bf16.msra.mxu0 %v1211
    %1777 = vmatmul.bf16.gmra.mxu0 %v76
    %v1778 = vpop.f32.mrf.mxu0
    %v1779 = vadd.f32 %v1766, %v1778
    %v1780 = vpop.f32.mrf.mxu0
    %1781 = vdwg.mxu0
    %1782 = vmatpush.bf16.msra.mxu0 %v1271
    %1783 = vmatpush.bf16.msra.mxu0 %v1267
    %1784 = vmatpush.bf16.msra.mxu0 %v1263
    %1785 = vmatpush.bf16.msra.mxu0 %v1259
    %1786 = vmatpush.bf16.msra.mxu0 %v1255
    %1787 = vmatpush.bf16.msra.mxu0 %v1251
    %1788 = vmatpush.bf16.msra.mxu0 %v1247
    %1789 = vmatpush.bf16.msra.mxu0 %v1243
    %1790 = vmatmul.bf16.gmra.mxu0 %v77
    %v1791 = vpop.f32.mrf.mxu0
    %v1792 = vadd.f32 %v1779, %v1791
    %v1793 = vpop.f32.mrf.mxu0
    %1794 = vdwg.mxu0
    %1795 = vmatpush.bf16.msra.mxu0 %v1303
    %1796 = vmatpush.bf16.msra.mxu0 %v1299
    %1797 = vmatpush.bf16.msra.mxu0 %v1295
    %1798 = vmatpush.bf16.msra.mxu0 %v1291
    %1799 = vmatpush.bf16.msra.mxu0 %v1287
    %1800 = vmatpush.bf16.msra.mxu0 %v1283
    %1801 = vmatpush.bf16.msra.mxu0 %v1279
    %1802 = vmatpush.bf16.msra.mxu0 %v1275
    %1803 = vmatmul.bf16.gmra.mxu0 %v78
    %v1804 = vpop.f32.mrf.mxu0
    %v1805 = vadd.f32 %v1792, %v1804
    %v1806 = vpop.f32.mrf.mxu0
    %1807 = vdwg.mxu0
    %1808 = vmatpush.bf16.msra.mxu0 %v1335
    %1809 = vmatpush.bf16.msra.mxu0 %v1331
    %1810 = vmatpush.bf16.msra.mxu0 %v1327
    %1811 = vmatpush.bf16.msra.mxu0 %v1323
    %1812 = vmatpush.bf16.msra.mxu0 %v1319
    %1813 = vmatpush.bf16.msra.mxu0 %v1315
    %1814 = vmatpush.bf16.msra.mxu0 %v1311
    %1815 = vmatpush.bf16.msra.mxu0 %v1307
    %1816 = vmatmul.bf16.gmra.mxu0 %v79
    %v1817 = vpop.f32.mrf.mxu0
    %v1818 = vadd.f32 %v1805, %v1817
    %v1819 = vpop.f32.mrf.mxu0
    %1820 = vdwg.mxu0
    %1821 = vmatpush.bf16.msra.mxu0 %v1367
    %1822 = vmatpush.bf16.msra.mxu0 %v1363
    %1823 = vmatpush.bf16.msra.mxu0 %v1359
    %1824 = vmatpush.bf16.msra.mxu0 %v1355
    %1825 = vmatpush.bf16.msra.mxu0 %v1351
    %1826 = vmatpush.bf16.msra.mxu0 %v1347
    %1827 = vmatpush.bf16.msra.mxu0 %v1343
    %1828 = vmatpush.bf16.msra.mxu0 %v1339
    %1829 = vmatmul.bf16.gmra.mxu0 %v80
    %v1830 = vpop.f32.mrf.mxu0
    %v1831 = vadd.f32 %v1818, %v1830
    %v1832 = vpop.f32.mrf.mxu0
    %1833 = vdwg.mxu0
    %1834 = vmatpush.bf16.msra.mxu0 %v1144
    %1835 = vmatpush.bf16.msra.mxu0 %v1140
    %1836 = vmatpush.bf16.msra.mxu0 %v1136
    %1837 = vmatpush.bf16.msra.mxu0 %v1132
    %1838 = vmatpush.bf16.msra.mxu0 %v1128
    %1839 = vmatpush.bf16.msra.mxu0 %v1124
    %1840 = vmatpush.bf16.msra.mxu0 %v1120
    %1841 = vmatpush.bf16.msra.mxu0 %v1116
    %1842 = vmatmul.bf16.gmra.mxu0 %v73
    %v1843 = vpop.f32.mrf.mxu0
    %v1844 = vadd.f32 %v340, %v1843
    %v1845 = vpop.f32.mrf.mxu0
    %1846 = vdwg.mxu0
    %1847 = vmatpush.bf16.msra.mxu0 %v1176
    %1848 = vmatpush.bf16.msra.mxu0 %v1172
    %1849 = vmatpush.bf16.msra.mxu0 %v1168
    %1850 = vmatpush.bf16.msra.mxu0 %v1164
    %1851 = vmatpush.bf16.msra.mxu0 %v1160
    %1852 = vmatpush.bf16.msra.mxu0 %v1156
    %1853 = vmatpush.bf16.msra.mxu0 %v1152
    %1854 = vmatpush.bf16.msra.mxu0 %v1148
    %1855 = vmatmul.bf16.gmra.mxu0 %v74
    %v1856 = vpop.f32.mrf.mxu0
    %v1857 = vadd.f32 %v1844, %v1856
    %v1858 = vpop.f32.mrf.mxu0
    %1859 = vdwg.mxu0
    %1860 = vmatpush.bf16.msra.mxu0 %v1208
    %1861 = vmatpush.bf16.msra.mxu0 %v1204
    %1862 = vmatpush.bf16.msra.mxu0 %v1200
    %1863 = vmatpush.bf16.msra.mxu0 %v1196
    %1864 = vmatpush.bf16.msra.mxu0 %v1192
    %1865 = vmatpush.bf16.msra.mxu0 %v1188
    %1866 = vmatpush.bf16.msra.mxu0 %v1184
    %1867 = vmatpush.bf16.msra.mxu0 %v1180
    %1868 = vmatmul.bf16.gmra.mxu0 %v75
    %v1869 = vpop.f32.mrf.mxu0
    %v1870 = vadd.f32 %v1857, %v1869
    %v1871 = vpop.f32.mrf.mxu0
    %1872 = vdwg.mxu0
    %1873 = vmatpush.bf16.msra.mxu0 %v1240
    %1874 = vmatpush.bf16.msra.mxu0 %v1236
    %1875 = vmatpush.bf16.msra.mxu0 %v1232
    %1876 = vmatpush.bf16.msra.mxu0 %v1228
    %1877 = vmatpush.bf16.msra.mxu0 %v1224
    %1878 = vmatpush.bf16.msra.mxu0 %v1220
    %1879 = vmatpush.bf16.msra.mxu0 %v1216
    %1880 = vmatpush.bf16.msra.mxu0 %v1212
    %1881 = vmatmul.bf16.gmra.mxu0 %v76
    %v1882 = vpop.f32.mrf.mxu0
    %v1883 = vadd.f32 %v1870, %v1882
    %v1884 = vpop.f32.mrf.mxu0
    %1885 = vdwg.mxu0
    %1886 = vmatpush.bf16.msra.mxu0 %v1272
    %1887 = vmatpush.bf16.msra.mxu0 %v1268
    %1888 = vmatpush.bf16.msra.mxu0 %v1264
    %1889 = vmatpush.bf16.msra.mxu0 %v1260
    %1890 = vmatpush.bf16.msra.mxu0 %v1256
    %1891 = vmatpush.bf16.msra.mxu0 %v1252
    %1892 = vmatpush.bf16.msra.mxu0 %v1248
    %1893 = vmatpush.bf16.msra.mxu0 %v1244
    %1894 = vmatmul.bf16.gmra.mxu0 %v77
    %v1895 = vpop.f32.mrf.mxu0
    %v1896 = vadd.f32 %v1883, %v1895
    %v1897 = vpop.f32.mrf.mxu0
    %1898 = vdwg.mxu0
    %1899 = vmatpush.bf16.msra.mxu0 %v1304
    %1900 = vmatpush.bf16.msra.mxu0 %v1300
    %1901 = vmatpush.bf16.msra.mxu0 %v1296
    %1902 = vmatpush.bf16.msra.mxu0 %v1292
    %1903 = vmatpush.bf16.msra.mxu0 %v1288
    %1904 = vmatpush.bf16.msra.mxu0 %v1284
    %1905 = vmatpush.bf16.msra.mxu0 %v1280
    %1906 = vmatpush.bf16.msra.mxu0 %v1276
    %1907 = vmatmul.bf16.gmra.mxu0 %v78
    %v1908 = vpop.f32.mrf.mxu0
    %v1909 = vadd.f32 %v1896, %v1908
    %v1910 = vpop.f32.mrf.mxu0
    %1911 = vdwg.mxu0
    %1912 = vmatpush.bf16.msra.mxu0 %v1336
    %1913 = vmatpush.bf16.msra.mxu0 %v1332
    %1914 = vmatpush.bf16.msra.mxu0 %v1328
    %1915 = vmatpush.bf16.msra.mxu0 %v1324
    %1916 = vmatpush.bf16.msra.mxu0 %v1320
    %1917 = vmatpush.bf16.msra.mxu0 %v1316
    %1918 = vmatpush.bf16.msra.mxu0 %v1312
    %1919 = vmatpush.bf16.msra.mxu0 %v1308
    %1920 = vmatmul.bf16.gmra.mxu0 %v79
    %v1921 = vpop.f32.mrf.mxu0
    %v1922 = vadd.f32 %v1909, %v1921
    %v1923 = vpop.f32.mrf.mxu0
    %1924 = vdwg.mxu0
    %1925 = vmatpush.bf16.msra.mxu0 %v1368
    %1926 = vmatpush.bf16.msra.mxu0 %v1364
    %1927 = vmatpush.bf16.msra.mxu0 %v1360
    %1928 = vmatpush.bf16.msra.mxu0 %v1356
    %1929 = vmatpush.bf16.msra.mxu0 %v1352
    %1930 = vmatpush.bf16.msra.mxu0 %v1348
    %1931 = vmatpush.bf16.msra.mxu0 %v1344
    %1932 = vmatpush.bf16.msra.mxu0 %v1340
    %1933 = vmatmul.bf16.gmra.mxu0 %v80
    %v1934 = vpop.f32.mrf.mxu0
    %v1935 = vadd.f32 %v1922, %v1934
    %v1936 = vpop.f32.mrf.mxu0
    %1937 = vdwg.mxu0
    %1938 = vmatpush.bf16.msra.mxu0 %v1145
    %1939 = vmatpush.bf16.msra.mxu0 %v1141
    %1940 = vmatpush.bf16.msra.mxu0 %v1137
    %1941 = vmatpush.bf16.msra.mxu0 %v1133
    %1942 = vmatpush.bf16.msra.mxu0 %v1129
    %1943 = vmatpush.bf16.msra.mxu0 %v1125
    %1944 = vmatpush.bf16.msra.mxu0 %v1121
    %1945 = vmatpush.bf16.msra.mxu0 %v1117
    %1946 = vmatmul.bf16.gmra.mxu0 %v73
    %v1947 = vpop.f32.mrf.mxu0
    %v1948 = vadd.f32 %v341, %v1947
    %v1949 = vpop.f32.mrf.mxu0
    %1950 = vdwg.mxu0
    %1951 = vmatpush.bf16.msra.mxu0 %v1177
    %1952 = vmatpush.bf16.msra.mxu0 %v1173
    %1953 = vmatpush.bf16.msra.mxu0 %v1169
    %1954 = vmatpush.bf16.msra.mxu0 %v1165
    %1955 = vmatpush.bf16.msra.mxu0 %v1161
    %1956 = vmatpush.bf16.msra.mxu0 %v1157
    %1957 = vmatpush.bf16.msra.mxu0 %v1153
    %1958 = vmatpush.bf16.msra.mxu0 %v1149
    %1959 = vmatmul.bf16.gmra.mxu0 %v74
    %v1960 = vpop.f32.mrf.mxu0
    %v1961 = vadd.f32 %v1948, %v1960
    %v1962 = vpop.f32.mrf.mxu0
    %1963 = vdwg.mxu0
    %1964 = vmatpush.bf16.msra.mxu0 %v1209
    %1965 = vmatpush.bf16.msra.mxu0 %v1205
    %1966 = vmatpush.bf16.msra.mxu0 %v1201
    %1967 = vmatpush.bf16.msra.mxu0 %v1197
    %1968 = vmatpush.bf16.msra.mxu0 %v1193
    %1969 = vmatpush.bf16.msra.mxu0 %v1189
    %1970 = vmatpush.bf16.msra.mxu0 %v1185
    %1971 = vmatpush.bf16.msra.mxu0 %v1181
    %1972 = vmatmul.bf16.gmra.mxu0 %v75
    %v1973 = vpop.f32.mrf.mxu0
    %v1974 = vadd.f32 %v1961, %v1973
    %v1975 = vpop.f32.mrf.mxu0
    %1976 = vdwg.mxu0
    %1977 = vmatpush.bf16.msra.mxu0 %v1241
    %1978 = vmatpush.bf16.msra.mxu0 %v1237
    %1979 = vmatpush.bf16.msra.mxu0 %v1233
    %1980 = vmatpush.bf16.msra.mxu0 %v1229
    %1981 = vmatpush.bf16.msra.mxu0 %v1225
    %1982 = vmatpush.bf16.msra.mxu0 %v1221
    %1983 = vmatpush.bf16.msra.mxu0 %v1217
    %1984 = vmatpush.bf16.msra.mxu0 %v1213
    %1985 = vmatmul.bf16.gmra.mxu0 %v76
    %v1986 = vpop.f32.mrf.mxu0
    %v1987 = vadd.f32 %v1974, %v1986
    %v1988 = vpop.f32.mrf.mxu0
    %1989 = vdwg.mxu0
    %1990 = vmatpush.bf16.msra.mxu0 %v1273
    %1991 = vmatpush.bf16.msra.mxu0 %v1269
    %1992 = vmatpush.bf16.msra.mxu0 %v1265
    %1993 = vmatpush.bf16.msra.mxu0 %v1261
    %1994 = vmatpush.bf16.msra.mxu0 %v1257
    %1995 = vmatpush.bf16.msra.mxu0 %v1253
    %1996 = vmatpush.bf16.msra.mxu0 %v1249
    %1997 = vmatpush.bf16.msra.mxu0 %v1245
    %1998 = vmatmul.bf16.gmra.mxu0 %v77
    %v1999 = vpop.f32.mrf.mxu0
    %v2000 = vadd.f32 %v1987, %v1999
    %v2001 = vpop.f32.mrf.mxu0
    %2002 = vdwg.mxu0
    %2003 = vmatpush.bf16.msra.mxu0 %v1305
    %2004 = vmatpush.bf16.msra.mxu0 %v1301
    %2005 = vmatpush.bf16.msra.mxu0 %v1297
    %2006 = vmatpush.bf16.msra.mxu0 %v1293
    %2007 = vmatpush.bf16.msra.mxu0 %v1289
    %2008 = vmatpush.bf16.msra.mxu0 %v1285
    %2009 = vmatpush.bf16.msra.mxu0 %v1281
    %2010 = vmatpush.bf16.msra.mxu0 %v1277
    %2011 = vmatmul.bf16.gmra.mxu0 %v78
    %v2012 = vpop.f32.mrf.mxu0
    %v2013 = vadd.f32 %v2000, %v2012
    %v2014 = vpop.f32.mrf.mxu0
    %2015 = vdwg.mxu0
    %2016 = vmatpush.bf16.msra.mxu0 %v1337
    %2017 = vmatpush.bf16.msra.mxu0 %v1333
    %2018 = vmatpush.bf16.msra.mxu0 %v1329
    %2019 = vmatpush.bf16.msra.mxu0 %v1325
    %2020 = vmatpush.bf16.msra.mxu0 %v1321
    %2021 = vmatpush.bf16.msra.mxu0 %v1317
    %2022 = vmatpush.bf16.msra.mxu0 %v1313
    %2023 = vmatpush.bf16.msra.mxu0 %v1309
    %2024 = vmatmul.bf16.gmra.mxu0 %v79
    %v2025 = vpop.f32.mrf.mxu0
    %v2026 = vadd.f32 %v2013, %v2025
    %v2027 = vpop.f32.mrf.mxu0
    %2028 = vdwg.mxu0
    %2029 = vmatpush.bf16.msra.mxu0 %v1369
    %2030 = vmatpush.bf16.msra.mxu0 %v1365
    %2031 = vmatpush.bf16.msra.mxu0 %v1361
    %2032 = vmatpush.bf16.msra.mxu0 %v1357
    %2033 = vmatpush.bf16.msra.mxu0 %v1353
    %2034 = vmatpush.bf16.msra.mxu0 %v1349
    %2035 = vmatpush.bf16.msra.mxu0 %v1345
    %2036 = vmatpush.bf16.msra.mxu0 %v1341
    %2037 = vmatmul.bf16.gmra.mxu0 %v80
    %v2038 = vpop.f32.mrf.mxu0
    %v2039 = vadd.f32 %v2026, %v2038
    %v2040 = vpop.f32.mrf.mxu0
    %2041 = vdwg.mxu0
    %v2042 = vmax.f32 %v1727, 0.0
    %v2043 = vmax.f32 %v1831, 0.0
    %v2044 = vmax.f32 %v1935, 0.0
    %v2045 = vmax.f32 %v2039, 0.0
    %v2046 = vpack.c.bf16 %v2042, %v2042
    %v2047 = vpack.c.bf16 %v2043, %v2043
    %v2048 = vpack.c.bf16 %v2044, %v2044
    %v2049 = vpack.c.bf16 %v2045, %v2045
    %v2050 = vld [vmem:[%s2] sm:$0xff]
    %v2051 = vld [vmem:[%s2 + $0x8] sm:$0xff]
    %v2052 = vld [vmem:[%s2 + $0x10] sm:$0xff]
    %v2053 = vld [vmem:[%s2 + $0x18] sm:$0xff]
    %v2054 = vld [vmem:[%s2 + $0x20] sm:$0xff]
    %v2055 = vld [vmem:[%s2 + $0x28] sm:$0xff]
    %v2056 = vld [vmem:[%s2 + $0x30] sm:$0xff]
    %v2057 = vld [vmem:[%s2 + $0x38] sm:$0xff]
    %v2058 = vld [vmem:[%s2 + $0x40] sm:$0xff]
    %v2059 = vld [vmem:[%s2 + $0x48] sm:$0xff]
    %v2060 = vld [vmem:[%s2 + $0x50] sm:$0xff]
    %v2061 = vld [vmem:[%s2 + $0x58] sm:$0xff]
    %v2062 = vld [vmem:[%s2 + $0x60] sm:$0xff]
    %v2063 = vld [vmem:[%s2 + $0x68] sm:$0xff]
    %v2064 = vld [vmem:[%s2 + $0x70] sm:$0xff]
    %v2065 = vld [vmem:[%s2 + $0x78] sm:$0xff]
    %v2066 = vld [vmem:[%s2 + $0x80] sm:$0xff]
    %v2067 = vld [vmem:[%s2 + $0x88] sm:$0xff]
    %v2068 = vld [vmem:[%s2 + $0x90] sm:$0xff]
    %v2069 = vld [vmem:[%s2 + $0x98] sm:$0xff]
    %v2070 = vld [vmem:[%s2 + $0xa0] sm:$0xff]
    %v2071 = vld [vmem:[%s2 + $0xa8] sm:$0xff]
    %v2072 = vld [vmem:[%s2 + $0xb0] sm:$0xff]
    %v2073 = vld [vmem:[%s2 + $0xb8] sm:$0xff]
    %v2074 = vld [vmem:[%s2 + $0xc0] sm:$0xff]
    %v2075 = vld [vmem:[%s2 + $0xc8] sm:$0xff]
    %v2076 = vld [vmem:[%s2 + $0xd0] sm:$0xff]
    %v2077 = vld [vmem:[%s2 + $0xd8] sm:$0xff]
    %v2078 = vld [vmem:[%s2 + $0xe0] sm:$0xff]
    %v2079 = vld [vmem:[%s2 + $0xe8] sm:$0xff]
    %v2080 = vld [vmem:[%s2 + $0xf0] sm:$0xff]
    %v2081 = vld [vmem:[%s2 + $0xf8] sm:$0xff]
    %v2082 = vld [vmem:[%s2 + $0x100] sm:$0xff]
    %v2083 = vld [vmem:[%s2 + $0x108] sm:$0xff]
    %v2084 = vld [vmem:[%s2 + $0x110] sm:$0xff]
    %v2085 = vld [vmem:[%s2 + $0x118] sm:$0xff]
    %v2086 = vld [vmem:[%s2 + $0x120] sm:$0xff]
    %v2087 = vld [vmem:[%s2 + $0x128] sm:$0xff]
    %v2088 = vld [vmem:[%s2 + $0x130] sm:$0xff]
    %v2089 = vld [vmem:[%s2 + $0x138] sm:$0xff]
    %v2090 = vld [vmem:[%s2 + $0x140] sm:$0xff]
    %v2091 = vld [vmem:[%s2 + $0x148] sm:$0xff]
    %v2092 = vld [vmem:[%s2 + $0x150] sm:$0xff]
    %v2093 = vld [vmem:[%s2 + $0x158] sm:$0xff]
    %v2094 = vld [vmem:[%s2 + $0x160] sm:$0xff]
    %v2095 = vld [vmem:[%s2 + $0x168] sm:$0xff]
    %v2096 = vld [vmem:[%s2 + $0x170] sm:$0xff]
    %v2097 = vld [vmem:[%s2 + $0x178] sm:$0xff]
    %v2098 = vld [vmem:[%s2 + $0x180] sm:$0xff]
    %v2099 = vld [vmem:[%s2 + $0x188] sm:$0xff]
    %v2100 = vld [vmem:[%s2 + $0x190] sm:$0xff]
    %v2101 = vld [vmem:[%s2 + $0x198] sm:$0xff]
    %v2102 = vld [vmem:[%s2 + $0x1a0] sm:$0xff]
    %v2103 = vld [vmem:[%s2 + $0x1a8] sm:$0xff]
    %v2104 = vld [vmem:[%s2 + $0x1b0] sm:$0xff]
    %v2105 = vld [vmem:[%s2 + $0x1b8] sm:$0xff]
    %v2106 = vld [vmem:[%s2 + $0x1c0] sm:$0xff]
    %v2107 = vld [vmem:[%s2 + $0x1c8] sm:$0xff]
    %v2108 = vld [vmem:[%s2 + $0x1d0] sm:$0xff]
    %v2109 = vld [vmem:[%s2 + $0x1d8] sm:$0xff]
    %v2110 = vld [vmem:[%s2 + $0x1e0] sm:$0xff]
    %v2111 = vld [vmem:[%s2 + $0x1e8] sm:$0xff]
    %v2112 = vld [vmem:[%s2 + $0x1f0] sm:$0xff]
    %v2113 = vld [vmem:[%s2 + $0x1f8] sm:$0xff]
    %v2115 = vperm.slane %v38, 0
    %v2116 = vperm.slane %v38, 1
    %v2183 = vunpack.c.l.b16 %v2050
    %v2184 = vunpack.c.h.b16 %v2050
    %v2185 = vunpack.c.l.b16 %v2051
    %v2186 = vunpack.c.h.b16 %v2051
    %v2187 = vunpack.c.l.b16 %v2052
    %v2188 = vunpack.c.h.b16 %v2052
    %v2189 = vunpack.c.l.b16 %v2053
    %v2190 = vunpack.c.h.b16 %v2053
    %v2191 = vunpack.c.l.b16 %v2054
    %v2192 = vunpack.c.h.b16 %v2054
    %v2193 = vunpack.c.l.b16 %v2055
    %v2194 = vunpack.c.h.b16 %v2055
    %v2195 = vunpack.c.l.b16 %v2056
    %v2196 = vunpack.c.h.b16 %v2056
    %v2197 = vunpack.c.l.b16 %v2057
    %v2198 = vunpack.c.h.b16 %v2057
    %v2199 = vunpack.c.l.b16 %v2058
    %v2200 = vunpack.c.h.b16 %v2058
    %v2201 = vunpack.c.l.b16 %v2059
    %v2202 = vunpack.c.h.b16 %v2059
    %v2203 = vunpack.c.l.b16 %v2060
    %v2204 = vunpack.c.h.b16 %v2060
    %v2205 = vunpack.c.l.b16 %v2061
    %v2206 = vunpack.c.h.b16 %v2061
    %v2207 = vunpack.c.l.b16 %v2062
    %v2208 = vunpack.c.h.b16 %v2062
    %v2209 = vunpack.c.l.b16 %v2063
    %v2210 = vunpack.c.h.b16 %v2063
    %v2211 = vunpack.c.l.b16 %v2064
    %v2212 = vunpack.c.h.b16 %v2064
    %v2213 = vunpack.c.l.b16 %v2065
    %v2214 = vunpack.c.h.b16 %v2065
    %v2215 = vunpack.c.l.b16 %v2066
    %v2216 = vunpack.c.h.b16 %v2066
    %v2217 = vunpack.c.l.b16 %v2067
    %v2218 = vunpack.c.h.b16 %v2067
    %v2219 = vunpack.c.l.b16 %v2068
    %v2220 = vunpack.c.h.b16 %v2068
    %v2221 = vunpack.c.l.b16 %v2069
    %v2222 = vunpack.c.h.b16 %v2069
    %v2223 = vunpack.c.l.b16 %v2070
    %v2224 = vunpack.c.h.b16 %v2070
    %v2225 = vunpack.c.l.b16 %v2071
    %v2226 = vunpack.c.h.b16 %v2071
    %v2227 = vunpack.c.l.b16 %v2072
    %v2228 = vunpack.c.h.b16 %v2072
    %v2229 = vunpack.c.l.b16 %v2073
    %v2230 = vunpack.c.h.b16 %v2073
    %v2231 = vunpack.c.l.b16 %v2074
    %v2232 = vunpack.c.h.b16 %v2074
    %v2233 = vunpack.c.l.b16 %v2075
    %v2234 = vunpack.c.h.b16 %v2075
    %v2235 = vunpack.c.l.b16 %v2076
    %v2236 = vunpack.c.h.b16 %v2076
    %v2237 = vunpack.c.l.b16 %v2077
    %v2238 = vunpack.c.h.b16 %v2077
    %v2239 = vunpack.c.l.b16 %v2078
    %v2240 = vunpack.c.h.b16 %v2078
    %v2241 = vunpack.c.l.b16 %v2079
    %v2242 = vunpack.c.h.b16 %v2079
    %v2243 = vunpack.c.l.b16 %v2080
    %v2244 = vunpack.c.h.b16 %v2080
    %v2245 = vunpack.c.l.b16 %v2081
    %v2246 = vunpack.c.h.b16 %v2081
    %v2247 = vunpack.c.l.b16 %v2082
    %v2248 = vunpack.c.h.b16 %v2082
    %v2249 = vunpack.c.l.b16 %v2083
    %v2250 = vunpack.c.h.b16 %v2083
    %v2251 = vunpack.c.l.b16 %v2084
    %v2252 = vunpack.c.h.b16 %v2084
    %v2253 = vunpack.c.l.b16 %v2085
    %v2254 = vunpack.c.h.b16 %v2085
    %v2255 = vunpack.c.l.b16 %v2086
    %v2256 = vunpack.c.h.b16 %v2086
    %v2257 = vunpack.c.l.b16 %v2087
    %v2258 = vunpack.c.h.b16 %v2087
    %v2259 = vunpack.c.l.b16 %v2088
    %v2260 = vunpack.c.h.b16 %v2088
    %v2261 = vunpack.c.l.b16 %v2089
    %v2262 = vunpack.c.h.b16 %v2089
    %v2263 = vunpack.c.l.b16 %v2090
    %v2264 = vunpack.c.h.b16 %v2090
    %v2265 = vunpack.c.l.b16 %v2091
    %v2266 = vunpack.c.h.b16 %v2091
    %v2267 = vunpack.c.l.b16 %v2092
    %v2268 = vunpack.c.h.b16 %v2092
    %v2269 = vunpack.c.l.b16 %v2093
    %v2270 = vunpack.c.h.b16 %v2093
    %v2271 = vunpack.c.l.b16 %v2094
    %v2272 = vunpack.c.h.b16 %v2094
    %v2273 = vunpack.c.l.b16 %v2095
    %v2274 = vunpack.c.h.b16 %v2095
    %v2275 = vunpack.c.l.b16 %v2096
    %v2276 = vunpack.c.h.b16 %v2096
    %v2277 = vunpack.c.l.b16 %v2097
    %v2278 = vunpack.c.h.b16 %v2097
    %v2279 = vunpack.c.l.b16 %v2098
    %v2280 = vunpack.c.h.b16 %v2098
    %v2281 = vunpack.c.l.b16 %v2099
    %v2282 = vunpack.c.h.b16 %v2099
    %v2283 = vunpack.c.l.b16 %v2100
    %v2284 = vunpack.c.h.b16 %v2100
    %v2285 = vunpack.c.l.b16 %v2101
    %v2286 = vunpack.c.h.b16 %v2101
    %v2287 = vunpack.c.l.b16 %v2102
    %v2288 = vunpack.c.h.b16 %v2102
    %v2289 = vunpack.c.l.b16 %v2103
    %v2290 = vunpack.c.h.b16 %v2103
    %v2291 = vunpack.c.l.b16 %v2104
    %v2292 = vunpack.c.h.b16 %v2104
    %v2293 = vunpack.c.l.b16 %v2105
    %v2294 = vunpack.c.h.b16 %v2105
    %v2295 = vunpack.c.l.b16 %v2106
    %v2296 = vunpack.c.h.b16 %v2106
    %v2297 = vunpack.c.l.b16 %v2107
    %v2298 = vunpack.c.h.b16 %v2107
    %v2299 = vunpack.c.l.b16 %v2108
    %v2300 = vunpack.c.h.b16 %v2108
    %v2301 = vunpack.c.l.b16 %v2109
    %v2302 = vunpack.c.h.b16 %v2109
    %v2303 = vunpack.c.l.b16 %v2110
    %v2304 = vunpack.c.h.b16 %v2110
    %v2305 = vunpack.c.l.b16 %v2111
    %v2306 = vunpack.c.h.b16 %v2111
    %v2307 = vunpack.c.l.b16 %v2112
    %v2308 = vunpack.c.h.b16 %v2112
    %v2309 = vunpack.c.l.b16 %v2113
    %v2310 = vunpack.c.h.b16 %v2113
    %v2311 = vpack.c.b16 %v2185, %v2183
    %v2312 = vpack.c.b16 %v2186, %v2184
    %v2313 = vpack.c.b16 %v2189, %v2187
    %v2314 = vpack.c.b16 %v2190, %v2188
    %v2315 = vpack.c.b16 %v2193, %v2191
    %v2316 = vpack.c.b16 %v2194, %v2192
    %v2317 = vpack.c.b16 %v2197, %v2195
    %v2318 = vpack.c.b16 %v2198, %v2196
    %v2319 = vpack.c.b16 %v2201, %v2199
    %v2320 = vpack.c.b16 %v2202, %v2200
    %v2321 = vpack.c.b16 %v2205, %v2203
    %v2322 = vpack.c.b16 %v2206, %v2204
    %v2323 = vpack.c.b16 %v2209, %v2207
    %v2324 = vpack.c.b16 %v2210, %v2208
    %v2325 = vpack.c.b16 %v2213, %v2211
    %v2326 = vpack.c.b16 %v2214, %v2212
    %v2327 = vpack.c.b16 %v2217, %v2215
    %v2328 = vpack.c.b16 %v2218, %v2216
    %v2329 = vpack.c.b16 %v2221, %v2219
    %v2330 = vpack.c.b16 %v2222, %v2220
    %v2331 = vpack.c.b16 %v2225, %v2223
    %v2332 = vpack.c.b16 %v2226, %v2224
    %v2333 = vpack.c.b16 %v2229, %v2227
    %v2334 = vpack.c.b16 %v2230, %v2228
    %v2335 = vpack.c.b16 %v2233, %v2231
    %v2336 = vpack.c.b16 %v2234, %v2232
    %v2337 = vpack.c.b16 %v2237, %v2235
    %v2338 = vpack.c.b16 %v2238, %v2236
    %v2339 = vpack.c.b16 %v2241, %v2239
    %v2340 = vpack.c.b16 %v2242, %v2240
    %v2341 = vpack.c.b16 %v2245, %v2243
    %v2342 = vpack.c.b16 %v2246, %v2244
    %v2343 = vpack.c.b16 %v2249, %v2247
    %v2344 = vpack.c.b16 %v2250, %v2248
    %v2345 = vpack.c.b16 %v2253, %v2251
    %v2346 = vpack.c.b16 %v2254, %v2252
    %v2347 = vpack.c.b16 %v2257, %v2255
    %v2348 = vpack.c.b16 %v2258, %v2256
    %v2349 = vpack.c.b16 %v2261, %v2259
    %v2350 = vpack.c.b16 %v2262, %v2260
    %v2351 = vpack.c.b16 %v2265, %v2263
    %v2352 = vpack.c.b16 %v2266, %v2264
    %v2353 = vpack.c.b16 %v2269, %v2267
    %v2354 = vpack.c.b16 %v2270, %v2268
    %v2355 = vpack.c.b16 %v2273, %v2271
    %v2356 = vpack.c.b16 %v2274, %v2272
    %v2357 = vpack.c.b16 %v2277, %v2275
    %v2358 = vpack.c.b16 %v2278, %v2276
    %v2359 = vpack.c.b16 %v2281, %v2279
    %v2360 = vpack.c.b16 %v2282, %v2280
    %v2361 = vpack.c.b16 %v2285, %v2283
    %v2362 = vpack.c.b16 %v2286, %v2284
    %v2363 = vpack.c.b16 %v2289, %v2287
    %v2364 = vpack.c.b16 %v2290, %v2288
    %v2365 = vpack.c.b16 %v2293, %v2291
    %v2366 = vpack.c.b16 %v2294, %v2292
    %v2367 = vpack.c.b16 %v2297, %v2295
    %v2368 = vpack.c.b16 %v2298, %v2296
    %v2369 = vpack.c.b16 %v2301, %v2299
    %v2370 = vpack.c.b16 %v2302, %v2300
    %v2371 = vpack.c.b16 %v2305, %v2303
    %v2372 = vpack.c.b16 %v2306, %v2304
    %v2373 = vpack.c.b16 %v2309, %v2307
    %v2374 = vpack.c.b16 %v2310, %v2308
    %2439 = vmatpush.bf16.msra.mxu0 %v2325
    %2440 = vmatpush.bf16.msra.mxu0 %v2323
    %2441 = vmatpush.bf16.msra.mxu0 %v2321
    %2442 = vmatpush.bf16.msra.mxu0 %v2319
    %2443 = vmatpush.bf16.msra.mxu0 %v2317
    %2444 = vmatpush.bf16.msra.mxu0 %v2315
    %2445 = vmatpush.bf16.msra.mxu0 %v2313
    %2446 = vmatpush.bf16.msra.mxu0 %v2311
    %2447 = vmatmul.bf16.gmra.mxu0 %v2046
    %v2448 = vpop.f32.mrf.mxu0
    %v2449 = vadd.f32 %v2115, %v2448
    %v2450 = vpop.f32.mrf.mxu0
    %2451 = vdwg.mxu0
    %2452 = vmatpush.bf16.msra.mxu0 %v2341
    %2453 = vmatpush.bf16.msra.mxu0 %v2339
    %2454 = vmatpush.bf16.msra.mxu0 %v2337
    %2455 = vmatpush.bf16.msra.mxu0 %v2335
    %2456 = vmatpush.bf16.msra.mxu0 %v2333
    %2457 = vmatpush.bf16.msra.mxu0 %v2331
    %2458 = vmatpush.bf16.msra.mxu0 %v2329
    %2459 = vmatpush.bf16.msra.mxu0 %v2327
    %2460 = vmatmul.bf16.gmra.mxu0 %v2047
    %v2461 = vpop.f32.mrf.mxu0
    %v2462 = vadd.f32 %v2449, %v2461
    %v2463 = vpop.f32.mrf.mxu0
    %2464 = vdwg.mxu0
    %2465 = vmatpush.bf16.msra.mxu0 %v2357
    %2466 = vmatpush.bf16.msra.mxu0 %v2355
    %2467 = vmatpush.bf16.msra.mxu0 %v2353
    %2468 = vmatpush.bf16.msra.mxu0 %v2351
    %2469 = vmatpush.bf16.msra.mxu0 %v2349
    %2470 = vmatpush.bf16.msra.mxu0 %v2347
    %2471 = vmatpush.bf16.msra.mxu0 %v2345
    %2472 = vmatpush.bf16.msra.mxu0 %v2343
    %2473 = vmatmul.bf16.gmra.mxu0 %v2048
    %v2474 = vpop.f32.mrf.mxu0
    %v2475 = vadd.f32 %v2462, %v2474
    %v2476 = vpop.f32.mrf.mxu0
    %2477 = vdwg.mxu0
    %2478 = vmatpush.bf16.msra.mxu0 %v2373
    %2479 = vmatpush.bf16.msra.mxu0 %v2371
    %2480 = vmatpush.bf16.msra.mxu0 %v2369
    %2481 = vmatpush.bf16.msra.mxu0 %v2367
    %2482 = vmatpush.bf16.msra.mxu0 %v2365
    %2483 = vmatpush.bf16.msra.mxu0 %v2363
    %2484 = vmatpush.bf16.msra.mxu0 %v2361
    %2485 = vmatpush.bf16.msra.mxu0 %v2359
    %2486 = vmatmul.bf16.gmra.mxu0 %v2049
    %v2487 = vpop.f32.mrf.mxu0
    %v2488 = vadd.f32 %v2475, %v2487
    %v2489 = vpop.f32.mrf.mxu0
    %2490 = vdwg.mxu0
    %2491 = vmatpush.bf16.msra.mxu0 %v2326
    %2492 = vmatpush.bf16.msra.mxu0 %v2324
    %2493 = vmatpush.bf16.msra.mxu0 %v2322
    %2494 = vmatpush.bf16.msra.mxu0 %v2320
    %2495 = vmatpush.bf16.msra.mxu0 %v2318
    %2496 = vmatpush.bf16.msra.mxu0 %v2316
    %2497 = vmatpush.bf16.msra.mxu0 %v2314
    %2498 = vmatpush.bf16.msra.mxu0 %v2312
    %2499 = vmatmul.bf16.gmra.mxu0 %v2046
    %v2500 = vpop.f32.mrf.mxu0
    %v2501 = vadd.f32 %v2116, %v2500
    %v2502 = vpop.f32.mrf.mxu0
    %2503 = vdwg.mxu0
    %2504 = vmatpush.bf16.msra.mxu0 %v2342
    %2505 = vmatpush.bf16.msra.mxu0 %v2340
    %2506 = vmatpush.bf16.msra.mxu0 %v2338
    %2507 = vmatpush.bf16.msra.mxu0 %v2336
    %2508 = vmatpush.bf16.msra.mxu0 %v2334
    %2509 = vmatpush.bf16.msra.mxu0 %v2332
    %2510 = vmatpush.bf16.msra.mxu0 %v2330
    %2511 = vmatpush.bf16.msra.mxu0 %v2328
    %2512 = vmatmul.bf16.gmra.mxu0 %v2047
    %v2513 = vpop.f32.mrf.mxu0
    %v2514 = vadd.f32 %v2501, %v2513
    %v2515 = vpop.f32.mrf.mxu0
    %2516 = vdwg.mxu0
    %2517 = vmatpush.bf16.msra.mxu0 %v2358
    %2518 = vmatpush.bf16.msra.mxu0 %v2356
    %2519 = vmatpush.bf16.msra.mxu0 %v2354
    %2520 = vmatpush.bf16.msra.mxu0 %v2352
    %2521 = vmatpush.bf16.msra.mxu0 %v2350
    %2522 = vmatpush.bf16.msra.mxu0 %v2348
    %2523 = vmatpush.bf16.msra.mxu0 %v2346
    %2524 = vmatpush.bf16.msra.mxu0 %v2344
    %2525 = vmatmul.bf16.gmra.mxu0 %v2048
    %v2526 = vpop.f32.mrf.mxu0
    %v2527 = vadd.f32 %v2514, %v2526
    %v2528 = vpop.f32.mrf.mxu0
    %2529 = vdwg.mxu0
    %2530 = vmatpush.bf16.msra.mxu0 %v2374
    %2531 = vmatpush.bf16.msra.mxu0 %v2372
    %2532 = vmatpush.bf16.msra.mxu0 %v2370
    %2533 = vmatpush.bf16.msra.mxu0 %v2368
    %2534 = vmatpush.bf16.msra.mxu0 %v2366
    %2535 = vmatpush.bf16.msra.mxu0 %v2364
    %2536 = vmatpush.bf16.msra.mxu0 %v2362
    %2537 = vmatpush.bf16.msra.mxu0 %v2360
    %2538 = vmatmul.bf16.gmra.mxu0 %v2049
    %v2539 = vpop.f32.mrf.mxu0
    %v2540 = vadd.f32 %v2527, %v2539
    %v2541 = vpop.f32.mrf.mxu0
    %2542 = vdwg.mxu0
    %v2543 = vmax.f32 %v2488, 0.0
    %v2544 = vmax.f32 %v2540, 0.0
    %v2545 = vld [vmem:[%s3] sm:$0xff]
    %v2546 = vld [vmem:[%s3 + $0x8] sm:$0xff]
    %v2547 = vld [vmem:[%s3 + $0x10] sm:$0xff]
    %v2548 = vld [vmem:[%s3 + $0x18] sm:$0xff]
    %v2549 = vld [vmem:[%s3 + $0x20] sm:$0xff]
    %v2550 = vld [vmem:[%s3 + $0x28] sm:$0xff]
    %v2551 = vld [vmem:[%s3 + $0x30] sm:$0xff]
    %v2552 = vld [vmem:[%s3 + $0x38] sm:$0xff]
    %v2553 = vld [vmem:[%s3 + $0x40] sm:$0xff]
    %v2554 = vld [vmem:[%s3 + $0x48] sm:$0xff]
    %v2555 = vld [vmem:[%s3 + $0x50] sm:$0xff]
    %v2556 = vld [vmem:[%s3 + $0x58] sm:$0xff]
    %v2557 = vld [vmem:[%s3 + $0x60] sm:$0xff]
    %v2558 = vld [vmem:[%s3 + $0x68] sm:$0xff]
    %v2559 = vld [vmem:[%s3 + $0x70] sm:$0xff]
    %v2560 = vld [vmem:[%s3 + $0x78] sm:$0xff]
    %v2561 = vld [vmem:[%s3 + $0x80] sm:$0xff]
    %v2562 = vld [vmem:[%s3 + $0x88] sm:$0xff]
    %v2563 = vld [vmem:[%s3 + $0x90] sm:$0xff]
    %v2564 = vld [vmem:[%s3 + $0x98] sm:$0xff]
    %v2565 = vld [vmem:[%s3 + $0xa0] sm:$0xff]
    %v2566 = vld [vmem:[%s3 + $0xa8] sm:$0xff]
    %v2567 = vld [vmem:[%s3 + $0xb0] sm:$0xff]
    %v2568 = vld [vmem:[%s3 + $0xb8] sm:$0xff]
    %v2569 = vld [vmem:[%s3 + $0xc0] sm:$0xff]
    %v2570 = vld [vmem:[%s3 + $0xc8] sm:$0xff]
    %v2571 = vld [vmem:[%s3 + $0xd0] sm:$0xff]
    %v2572 = vld [vmem:[%s3 + $0xd8] sm:$0xff]
    %v2573 = vld [vmem:[%s3 + $0xe0] sm:$0xff]
    %v2574 = vld [vmem:[%s3 + $0xe8] sm:$0xff]
    %v2575 = vld [vmem:[%s3 + $0xf0] sm:$0xff]
    %v2576 = vld [vmem:[%s3 + $0xf8] sm:$0xff]
    %2577 = vmatpush.msra.mxu0 %v2560
    %2578 = vmatpush.msra.mxu0 %v2559
    %2579 = vmatpush.msra.mxu0 %v2558
    %2580 = vmatpush.msra.mxu0 %v2557
    %2581 = vmatpush.msra.mxu0 %v2556
    %2582 = vmatpush.msra.mxu0 %v2555
    %2583 = vmatpush.msra.mxu0 %v2554
    %2584 = vmatpush.msra.mxu0 %v2553
    %2585 = vmatpush.msra.mxu0 %v2552
    %2586 = vmatpush.msra.mxu0 %v2551
    %2587 = vmatpush.msra.mxu0 %v2550
    %2588 = vmatpush.msra.mxu0 %v2549
    %2589 = vmatpush.msra.mxu0 %v2548
    %2590 = vmatpush.msra.mxu0 %v2547
    %2591 = vmatpush.msra.mxu0 %v2546
    %2592 = vmatpush.msra.mxu0 %v2545
    %2593 = vmatmul.f32.gmra.mxu0 %v2543
    %v2594 = vpop.f32.mrf.mxu0
    %v2595 = vadd.f32 %v39, %v2594
    %2596 = vdwg.mxu0
    %2597 = vmatpush.msra.mxu0 %v2576
    %2598 = vmatpush.msra.mxu0 %v2575
    %2599 = vmatpush.msra.mxu0 %v2574
    %2600 = vmatpush.msra.mxu0 %v2573
    %2601 = vmatpush.msra.mxu0 %v2572
    %2602 = vmatpush.msra.mxu0 %v2571
    %2603 = vmatpush.msra.mxu0 %v2570
    %2604 = vmatpush.msra.mxu0 %v2569
    %2605 = vmatpush.msra.mxu0 %v2568
    %2606 = vmatpush.msra.mxu0 %v2567
    %2607 = vmatpush.msra.mxu0 %v2566
    %2608 = vmatpush.msra.mxu0 %v2565
    %2609 = vmatpush.msra.mxu0 %v2564
    %2610 = vmatpush.msra.mxu0 %v2563
    %2611 = vmatpush.msra.mxu0 %v2562
    %2612 = vmatpush.msra.mxu0 %v2561
    %2613 = vmatmul.f32.gmra.mxu0 %v2544
    %v2614 = vpop.f32.mrf.mxu0
    %v2615 = vadd.f32 %v2595, %v2614
    %2616 = vdwg.mxu0
    %v2617 = vmax.f32 %v2615, 0.0
    %v2618 = vmul.f32 %v2617, %v40
    %vm2619 = vcmask 257024
    %v2620 = vsel %vm2619, %v2618, 0.0
    %2621 = vadd.xlane.f32.xlu0 %v2620
    %v2622 = vpop.xlane.xlu0 %2621
    %v2623 = vadd.f32 %v2622, %v41
    %vm2624 = vcmask 3072
    %2625 = vst.msk [vmem:[%s5] sm:$0xf] %vm2624, %v2623
    // Predicated region
    $region26: #{value_net_forward.1} parent=1 // pred_check
      _
    $region27: #{value_net_forward.1} parent=1 // pred_check_branch
      %2627 = sbr.rel (0) target = $region29
    $region28: #{value_net_forward.1} parent=1 // pred_region
      _
    $region29: #{value_net_forward.1} parent=1 // pred_fallthru
      _
    // Predicated region
    $region30: #{value_net_forward.1} parent=1 // pred_check
      _
    $region31: #{value_net_forward.1} parent=1 // pred_check_branch
      %2629 = sbr.rel (0) target = $region33
    $region32: #{value_net_forward.1} parent=1 // pred_region
      _
    $region33: #{value_net_forward.1} parent=1 // pred_fallthru
      _
    %2630 = vsyncpa [#allocation3], 1

</llo_original>
